<compile_context>
chip_gen: v7x
topology: tpu7x:2x2x1
jax: 0.10.0
libtpu: 0.0.40
codegen_flags: <defaults>
</compile_context>

<pallas_src>
import math
import functools

import jax
import jax.numpy as jnp
from jax.experimental import pallas as pl
from jax.experimental.pallas import tpu as pltpu


def _fused_mha_kernel(h, d_per, L, d_model, bt,
                      xs_ref, wqkv_ref, bqkv_ref, wo_ref, bo_ref,
                      out_ref, s_scr, v_scr):
    """One batch tile: fused QKV projection, 3 cached self-scores, 3 output slots."""
    f32 = jnp.float32
    cdt = wqkv_ref.dtype                        # matmul-operand dtype (bf16 or f32)
    hd = h * d_per
    # Matches reference softmax((s1 + s2) / 2) with each score divided by sqrt(d_per).
    inv_scale = 1.0 / (2.0 * math.sqrt(d_per))

    w_qkv = wqkv_ref[...]                       # [d_model, 3*hd]  (VMEM-resident across grid)
    b_qkv = bqkv_ref[...]                       # [1, 3*hd] f32

    for b in range(bt):
        # ---- 1. One lane-dense projection for all slots and all of Q/K/V.
        rows = xs_ref[b]                                                  # [3*L, d_model]
        qkv = jnp.dot(rows, w_qkv, preferred_element_type=f32) + b_qkv    # [3*L, 3*hd] f32

        q2d = (qkv[:, 0 * hd:1 * hd] * inv_scale).astype(cdt)             # scale folded into Q
        k2d = qkv[:, 1 * hd:2 * hd].astype(cdt)
        v2d = qkv[:, 2 * hd:3 * hd].astype(cdt)

        def split_heads(t):                     # [3*L, hd] -> [h, 3*L, d_per]
            return jnp.stack([t[:, i * d_per:(i + 1) * d_per] for i in range(h)], axis=0)

        qh, kh, vh = split_heads(q2d), split_heads(k2d), split_heads(v2d)

        # ---- 2. Self-scores per input slot, computed once and cached (each reused twice).
        for s in range(3):
            sl = slice(s * L, (s + 1) * L)
            s_scr[s] = jnp.einsum('hld,hmd->hlm', qh[:, sl, :], kh[:, sl, :],
                                  preferred_element_type=f32)             # [h, L, L] f32
            v_scr[s] = vh[:, sl, :]                                       # [h, L, d_per]

        # ---- 3. One output slot at a time; scf.for bounds the softmax/context live set.
        @pl.loop(0, 3)
        def _(slot):                             # 0 -> H_new, 1 -> T_new, 2 -> R_new
            a = jnp.where(slot == 2, 0, slot + 1)
            c = jnp.where(slot == 0, 2, slot - 1)
            logits = s_scr[a] + s_scr[c]                                  # VPU add (cached)
            m = jnp.max(logits, axis=-1, keepdims=True)                   # f32 softmax
            e = jnp.exp(logits - m)
            p = (e * pl.reciprocal(jnp.sum(e, axis=-1, keepdims=True),
                                   approx=True)).astype(cdt)
            ctx = jnp.einsum('hlm,hmd->hld', p, v_scr[slot],
                             preferred_element_type=f32).astype(cdt)      # [h, L, d_per]
            # Head concat (XLU relayout) -> single K = h*d_per output projection.
            ctx2d = jnp.concatenate([ctx[i] for i in range(h)], axis=-1)  # [L, hd]
            o = jnp.dot(ctx2d, wo_ref[...], preferred_element_type=f32) + bo_ref[...]
            out_ref[b, slot] = o.astype(out_ref.dtype)


def multi_headed_attention_forward(x, params, h, d_per, *,
                                   compute_dtype=jnp.bfloat16, batch_tile=1,
                                   vmem_limit_bytes=64 * 1024 * 1024):
    """Pallas version of MultiHeadedAttention.forward.  x: [B, L, 3, d_model]."""
    B, L, three, d_model = x.shape
    assert three == 3
    wq, bq, wk, bk, wv, bv, wo, bo = params
    hd = h * d_per
    bt = batch_tile
    assert B % bt == 0

    # Slot-major rows [B, 3*L, d_model]: leading-dim merge done here (free in XLA) so the
    # kernel does a single full-block load with d_model on the lane axis.
    xs = jnp.transpose(x, (0, 2, 1, 3)).reshape(B, 3 * L, d_model).astype(compute_dtype)

    # Fused projection weights, built once outside the kernel.
    w_qkv = jnp.concatenate([wq, wk, wv], axis=1).astype(compute_dtype)       # [d_model, 3*hd]
    b_qkv = jnp.concatenate([bq.reshape(1, hd), bk.reshape(1, hd),
                             bv.reshape(1, hd)], axis=1).astype(jnp.float32)  # [1, 3*hd]
    wo_c = wo.astype(compute_dtype)                                           # [hd, d_model]
    bo_c = bo.reshape(1, d_model).astype(jnp.float32)

    kernel = functools.partial(_fused_mha_kernel, h, d_per, L, d_model, bt)

    in_spec = pl.BlockSpec((bt, 3 * L, d_model), lambda i: (i, 0, 0))
    out_spec = pl.BlockSpec((bt, 3, L, d_model), lambda i: (i, 0, 0, 0))

    def const2(shape):                        # weights: fetched once, VMEM-resident
        return pl.BlockSpec(shape, lambda i: (0, 0))

    out = pl.pallas_call(
        kernel,
        out_shape=jax.ShapeDtypeStruct((B, 3, L, d_model), x.dtype),
        grid=(B // bt,),
        in_specs=[in_spec,
                  const2((d_model, 3 * hd)),   # W_qkv
                  const2((1, 3 * hd)),         # b_qkv
                  const2((hd, d_model)),       # W_o
                  const2((1, d_model))],       # b_o
        out_specs=out_spec,
        scratch_shapes=[pltpu.VMEM((3, h, L, L), jnp.float32),        # cached self-scores
                        pltpu.VMEM((3, h, L, d_per), compute_dtype)], # per-slot values
        compiler_params=pltpu.CompilerParams(
            dimension_semantics=("parallel",),
            vmem_limit_bytes=vmem_limit_bytes),
    )(xs, w_qkv, b_qkv, wo_c, bo_c)

    return jnp.transpose(out, (0, 2, 1, 3))               # [B, L, 3, d_model]


# ----------------------- pure-JAX reference (for verification) -----------------------
def _ref_mha(Q1, K1, Q2, K2, V, params, h, d_per):
    wq, bq, wk, bk, wv, bv, wo, bo = params

    def proj(x, w, b):
        B, L, _ = x.shape
        y = x @ w + b
        return y.reshape(B, L, h, d_per).transpose(0, 2, 1, 3)    # [B,h,L,d_per]

    q1 = proj(Q1, wq, bq); k1 = proj(K1, wk, bk)
    q2 = proj(Q2, wq, bq); k2 = proj(K2, wk, bk)
    v = proj(V, wv, bv)
    s1 = jnp.einsum('bhld,bhmd->bhlm', q1, k1) / math.sqrt(d_per)
    s2 = jnp.einsum('bhld,bhmd->bhlm', q2, k2) / math.sqrt(d_per)
    p = jax.nn.softmax((s1 + s2) / 2.0, axis=-1)
    ctx = jnp.einsum('bhlm,bhmd->bhld', p, v)
    B, _, L, _ = ctx.shape
    ctx = ctx.transpose(0, 2, 1, 3).reshape(B, L, h * d_per)
    return ctx @ wo + bo


def _ref_forward(x, params, h, d_per):
    H, T, R = x[:, :, 0, :], x[:, :, 1, :], x[:, :, 2, :]
    return jnp.stack([
        _ref_mha(T, T, R, R, H, params, h, d_per),
        _ref_mha(H, H, R, R, T, params, h, d_per),
        _ref_mha(H, H, T, T, R, params, h, d_per),
    ], axis=-2)


if __name__ == "__main__":
    # Small deterministic config consistent with the module.
    B, L = 2, 8
    h, d_per = 4, 8
    d_model = 32
    hd = h * d_per

    key = jax.random.PRNGKey(0)
    kx, kwq, kbq, kwk, kbk, kwv, kbv, kwo, kbo = jax.random.split(key, 9)

    x = jax.random.normal(kx, (B, L, 3, d_model), dtype=jnp.float32)

    scale_in = 1.0 / math.sqrt(d_model)
    scale_out = 1.0 / math.sqrt(hd)
    params = (
        jax.random.uniform(kwq, (d_model, hd), jnp.float32, -scale_in, scale_in),
        jax.random.uniform(kbq, (1, hd), jnp.float32, -scale_in, scale_in),
        jax.random.uniform(kwk, (d_model, hd), jnp.float32, -scale_in, scale_in),
        jax.random.uniform(kbk, (1, hd), jnp.float32, -scale_in, scale_in),
        jax.random.uniform(kwv, (d_model, hd), jnp.float32, -scale_in, scale_in),
        jax.random.uniform(kbv, (1, hd), jnp.float32, -scale_in, scale_in),
        jax.random.uniform(kwo, (hd, d_model), jnp.float32, -scale_out, scale_out),
        jax.random.uniform(kbo, (1, d_model), jnp.float32, -scale_out, scale_out),
    )

    ref = _ref_forward(x, params, h, d_per)

    # f32-operand path (tighter check; tolerance covers the approx EUP reciprocal).
    out_f32 = multi_headed_attention_forward(x, params, h, d_per,
                                             compute_dtype=jnp.float32)
    out_f32 = jax.block_until_ready(out_f32)
    assert out_f32.shape == (B, L, 3, d_model), out_f32.shape
    assert jnp.allclose(out_f32, ref, atol=1e-2, rtol=1e-2), "f32 path mismatch"

    # Default bf16 matmul-operand path (f32 accumulation / f32 softmax).
    out_bf16 = multi_headed_attention_forward(x, params, h, d_per)
    out_bf16 = jax.block_until_ready(out_bf16)
    assert out_bf16.shape == (B, L, 3, d_model), out_bf16.shape
    assert jnp.allclose(out_bf16, ref, atol=5e-2, rtol=5e-2), "bf16 path mismatch"

    print("KERNEL_OK")
</pallas_src>

<mosaic_0001>
module attributes {stable_mosaic.version = 11 : i64} {
  func.func @_fused_mha_kernel(%arg0: i32, %arg1: memref<1x24x32xf32, #tpu.memory_space<vmem>>, %arg2: memref<32x96xf32, #tpu.memory_space<vmem>>, %arg3: memref<1x96xf32, #tpu.memory_space<vmem>>, %arg4: memref<32x32xf32, #tpu.memory_space<vmem>>, %arg5: memref<1x32xf32, #tpu.memory_space<vmem>>, %arg6: memref<1x3x8x32xf32, #tpu.memory_space<vmem>>, %arg7: memref<3x4x8x8xf32, #tpu.memory_space<vmem>>, %arg8: memref<3x4x8x8xf32, #tpu.memory_space<vmem>>) attributes {dimension_semantics = [#tpu.dimension_semantics<parallel>], iteration_bounds = array<i64: 2>, scalar_prefetch = 0 : i64, scratch_operands = 2 : i64, tpu.core_type = #tpu.core_type<tc>, window_params = [{transform_indices = @transform_0, window_bounds = array<i64: 1, 24, 32>}, {pipeline_mode = #tpu.pipeline_mode<synchronous>, transform_indices = @transform_1, window_bounds = array<i64: 32, 96>}, {pipeline_mode = #tpu.pipeline_mode<synchronous>, transform_indices = @transform_2, window_bounds = array<i64: 1, 96>}, {pipeline_mode = #tpu.pipeline_mode<synchronous>, transform_indices = @transform_3, window_bounds = array<i64: 32, 32>}, {pipeline_mode = #tpu.pipeline_mode<synchronous>, transform_indices = @transform_4, window_bounds = array<i64: 1, 32>}, {transform_indices = @transform_5, window_bounds = array<i64: 1, 3, 8, 32>}]} {
    %c0 = arith.constant 0 : index
    %c0_0 = arith.constant 0 : index
    %0 = vector.load %arg2[%c0, %c0_0] : memref<32x96xf32, #tpu.memory_space<vmem>>, vector<32x96xf32>
    %c0_1 = arith.constant 0 : index
    %c0_2 = arith.constant 0 : index
    %1 = vector.load %arg3[%c0_1, %c0_2] : memref<1x96xf32, #tpu.memory_space<vmem>>, vector<1x96xf32>
    %c0_3 = arith.constant 0 : index
    %c0_4 = arith.constant 0 : index
    %c0_5 = arith.constant 0 : index
    %2 = vector.load %arg1[%c0_3, %c0_4, %c0_5] : memref<1x24x32xf32, #tpu.memory_space<vmem>>, vector<1x24x32xf32>
    %3 = vector.shape_cast %2 : vector<1x24x32xf32> to vector<24x32xf32>
    %cst = arith.constant dense<0.000000e+00> : vector<24x96xf32>
    %4 = tpu.matmul %3, %0, %cst {dimension_numbers = #tpu.dot_dimension_numbers<[1], [0], [0], [1], [0, 0, 1, 1], [], []>} : vector<24x32xf32>, vector<32x96xf32>, vector<24x96xf32> -> vector<24x96xf32>
    %5 = vector.broadcast %1 : vector<1x96xf32> to vector<24x96xf32>
    %6 = arith.addf %4, %5 : vector<24x96xf32>
    %7 = vector.extract_strided_slice %6 {offsets = [0, 0], sizes = [24, 32], strides = [1, 1]} : vector<24x96xf32> to vector<24x32xf32>
    %cst_6 = arith.constant 0.176776692 : f32
    %8 = vector.broadcast %cst_6 : f32 to vector<24x32xf32>
    %9 = arith.mulf %7, %8 : vector<24x32xf32>
    %10 = vector.extract_strided_slice %6 {offsets = [0, 32], sizes = [24, 32], strides = [1, 1]} : vector<24x96xf32> to vector<24x32xf32>
    %11 = vector.extract_strided_slice %6 {offsets = [0, 64], sizes = [24, 32], strides = [1, 1]} : vector<24x96xf32> to vector<24x32xf32>
    %12 = vector.extract_strided_slice %9 {offsets = [0, 0], sizes = [24, 8], strides = [1, 1]} : vector<24x32xf32> to vector<24x8xf32>
    %13 = vector.extract_strided_slice %9 {offsets = [0, 8], sizes = [24, 8], strides = [1, 1]} : vector<24x32xf32> to vector<24x8xf32>
    %14 = vector.extract_strided_slice %9 {offsets = [0, 16], sizes = [24, 8], strides = [1, 1]} : vector<24x32xf32> to vector<24x8xf32>
    %15 = vector.extract_strided_slice %9 {offsets = [0, 24], sizes = [24, 8], strides = [1, 1]} : vector<24x32xf32> to vector<24x8xf32>
    %16 = vector.shape_cast %12 : vector<24x8xf32> to vector<1x24x8xf32>
    %17 = vector.shape_cast %13 : vector<24x8xf32> to vector<1x24x8xf32>
    %18 = vector.shape_cast %14 : vector<24x8xf32> to vector<1x24x8xf32>
    %19 = vector.shape_cast %15 : vector<24x8xf32> to vector<1x24x8xf32>
    %20 = tpu.concatenate %16, %17, %18, %19 in 0 : vector<1x24x8xf32>, vector<1x24x8xf32>, vector<1x24x8xf32>, vector<1x24x8xf32> -> vector<4x24x8xf32>
    %21 = vector.extract_strided_slice %10 {offsets = [0, 0], sizes = [24, 8], strides = [1, 1]} : vector<24x32xf32> to vector<24x8xf32>
    %22 = vector.extract_strided_slice %10 {offsets = [0, 8], sizes = [24, 8], strides = [1, 1]} : vector<24x32xf32> to vector<24x8xf32>
    %23 = vector.extract_strided_slice %10 {offsets = [0, 16], sizes = [24, 8], strides = [1, 1]} : vector<24x32xf32> to vector<24x8xf32>
    %24 = vector.extract_strided_slice %10 {offsets = [0, 24], sizes = [24, 8], strides = [1, 1]} : vector<24x32xf32> to vector<24x8xf32>
    %25 = vector.shape_cast %21 : vector<24x8xf32> to vector<1x24x8xf32>
    %26 = vector.shape_cast %22 : vector<24x8xf32> to vector<1x24x8xf32>
    %27 = vector.shape_cast %23 : vector<24x8xf32> to vector<1x24x8xf32>
    %28 = vector.shape_cast %24 : vector<24x8xf32> to vector<1x24x8xf32>
    %29 = tpu.concatenate %25, %26, %27, %28 in 0 : vector<1x24x8xf32>, vector<1x24x8xf32>, vector<1x24x8xf32>, vector<1x24x8xf32> -> vector<4x24x8xf32>
    %30 = vector.extract_strided_slice %11 {offsets = [0, 0], sizes = [24, 8], strides = [1, 1]} : vector<24x32xf32> to vector<24x8xf32>
    %31 = vector.extract_strided_slice %11 {offsets = [0, 8], sizes = [24, 8], strides = [1, 1]} : vector<24x32xf32> to vector<24x8xf32>
    %32 = vector.extract_strided_slice %11 {offsets = [0, 16], sizes = [24, 8], strides = [1, 1]} : vector<24x32xf32> to vector<24x8xf32>
    %33 = vector.extract_strided_slice %11 {offsets = [0, 24], sizes = [24, 8], strides = [1, 1]} : vector<24x32xf32> to vector<24x8xf32>
    %34 = vector.shape_cast %30 : vector<24x8xf32> to vector<1x24x8xf32>
    %35 = vector.shape_cast %31 : vector<24x8xf32> to vector<1x24x8xf32>
    %36 = vector.shape_cast %32 : vector<24x8xf32> to vector<1x24x8xf32>
    %37 = vector.shape_cast %33 : vector<24x8xf32> to vector<1x24x8xf32>
    %38 = tpu.concatenate %34, %35, %36, %37 in 0 : vector<1x24x8xf32>, vector<1x24x8xf32>, vector<1x24x8xf32>, vector<1x24x8xf32> -> vector<4x24x8xf32>
    %39 = vector.extract_strided_slice %20 {offsets = [0, 0, 0], sizes = [4, 8, 8], strides = [1, 1, 1]} : vector<4x24x8xf32> to vector<4x8x8xf32>
    %40 = vector.extract_strided_slice %29 {offsets = [0, 0, 0], sizes = [4, 8, 8], strides = [1, 1, 1]} : vector<4x24x8xf32> to vector<4x8x8xf32>
    "tpu.trace_start"() <{level = 10 : i32, message = "hld,hmd->hlm"}> : () -> ()
    %cst_7 = arith.constant dense<0.000000e+00> : vector<4x8x8xf32>
    %41 = tpu.matmul %39, %40, %cst_7 {dimension_numbers = #tpu.dot_dimension_numbers<[2], [2], [1], [1], [0, 0, 0, 1, 1, 1], [0], [0]>} : vector<4x8x8xf32>, vector<4x8x8xf32>, vector<4x8x8xf32> -> vector<4x8x8xf32>
    "tpu.trace_stop"() : () -> ()
    %c0_8 = arith.constant 0 : index
    %c0_9 = arith.constant 0 : index
    %c0_10 = arith.constant 0 : index
    %c0_11 = arith.constant 0 : index
    %42 = vector.load %arg7[%c0_8, %c0_9, %c0_10, %c0_11] : memref<3x4x8x8xf32, #tpu.memory_space<vmem>>, vector<1x4x8x8xf32>
    %43 = vector.shape_cast %42 : vector<1x4x8x8xf32> to vector<4x8x8xf32>
    %44 = vector.shape_cast %41 : vector<4x8x8xf32> to vector<1x4x8x8xf32>
    tpu.vector_store %arg7[%c0_8, %c0_9, %c0_10, %c0_11], %44 {strides = array<i32>} : memref<3x4x8x8xf32, #tpu.memory_space<vmem>>, vector<1x4x8x8xf32>,
    %45 = vector.extract_strided_slice %38 {offsets = [0, 0, 0], sizes = [4, 8, 8], strides = [1, 1, 1]} : vector<4x24x8xf32> to vector<4x8x8xf32>
    %c0_12 = arith.constant 0 : index
    %c0_13 = arith.constant 0 : index
    %c0_14 = arith.constant 0 : index
    %c0_15 = arith.constant 0 : index
    %46 = vector.load %arg8[%c0_12, %c0_13, %c0_14, %c0_15] : memref<3x4x8x8xf32, #tpu.memory_space<vmem>>, vector<1x4x8x8xf32>
    %47 = vector.shape_cast %46 : vector<1x4x8x8xf32> to vector<4x8x8xf32>
    %48 = vector.shape_cast %45 : vector<4x8x8xf32> to vector<1x4x8x8xf32>
    tpu.vector_store %arg8[%c0_12, %c0_13, %c0_14, %c0_15], %48 {strides = array<i32>} : memref<3x4x8x8xf32, #tpu.memory_space<vmem>>, vector<1x4x8x8xf32>,
    %49 = vector.extract_strided_slice %20 {offsets = [0, 8, 0], sizes = [4, 8, 8], strides = [1, 1, 1]} : vector<4x24x8xf32> to vector<4x8x8xf32>
    %50 = vector.extract_strided_slice %29 {offsets = [0, 8, 0], sizes = [4, 8, 8], strides = [1, 1, 1]} : vector<4x24x8xf32> to vector<4x8x8xf32>
    "tpu.trace_start"() <{level = 10 : i32, message = "hld,hmd->hlm"}> : () -> ()
    %cst_16 = arith.constant dense<0.000000e+00> : vector<4x8x8xf32>
    %51 = tpu.matmul %49, %50, %cst_16 {dimension_numbers = #tpu.dot_dimension_numbers<[2], [2], [1], [1], [0, 0, 0, 1, 1, 1], [0], [0]>} : vector<4x8x8xf32>, vector<4x8x8xf32>, vector<4x8x8xf32> -> vector<4x8x8xf32>
    "tpu.trace_stop"() : () -> ()
    %c1 = arith.constant 1 : index
    %c0_17 = arith.constant 0 : index
    %c0_18 = arith.constant 0 : index
    %c0_19 = arith.constant 0 : index
    %52 = vector.load %arg7[%c1, %c0_17, %c0_18, %c0_19] : memref<3x4x8x8xf32, #tpu.memory_space<vmem>>, vector<1x4x8x8xf32>
    %53 = vector.shape_cast %52 : vector<1x4x8x8xf32> to vector<4x8x8xf32>
    %54 = vector.shape_cast %51 : vector<4x8x8xf32> to vector<1x4x8x8xf32>
    tpu.vector_store %arg7[%c1, %c0_17, %c0_18, %c0_19], %54 {strides = array<i32>} : memref<3x4x8x8xf32, #tpu.memory_space<vmem>>, vector<1x4x8x8xf32>,
    %55 = vector.extract_strided_slice %38 {offsets = [0, 8, 0], sizes = [4, 8, 8], strides = [1, 1, 1]} : vector<4x24x8xf32> to vector<4x8x8xf32>
    %c1_20 = arith.constant 1 : index
    %c0_21 = arith.constant 0 : index
    %c0_22 = arith.constant 0 : index
    %c0_23 = arith.constant 0 : index
    %56 = vector.load %arg8[%c1_20, %c0_21, %c0_22, %c0_23] : memref<3x4x8x8xf32, #tpu.memory_space<vmem>>, vector<1x4x8x8xf32>
    %57 = vector.shape_cast %56 : vector<1x4x8x8xf32> to vector<4x8x8xf32>
    %58 = vector.shape_cast %55 : vector<4x8x8xf32> to vector<1x4x8x8xf32>
    tpu.vector_store %arg8[%c1_20, %c0_21, %c0_22, %c0_23], %58 {strides = array<i32>} : memref<3x4x8x8xf32, #tpu.memory_space<vmem>>, vector<1x4x8x8xf32>,
    %59 = vector.extract_strided_slice %20 {offsets = [0, 16, 0], sizes = [4, 8, 8], strides = [1, 1, 1]} : vector<4x24x8xf32> to vector<4x8x8xf32>
    %60 = vector.extract_strided_slice %29 {offsets = [0, 16, 0], sizes = [4, 8, 8], strides = [1, 1, 1]} : vector<4x24x8xf32> to vector<4x8x8xf32>
    "tpu.trace_start"() <{level = 10 : i32, message = "hld,hmd->hlm"}> : () -> ()
    %cst_24 = arith.constant dense<0.000000e+00> : vector<4x8x8xf32>
    %61 = tpu.matmul %59, %60, %cst_24 {dimension_numbers = #tpu.dot_dimension_numbers<[2], [2], [1], [1], [0, 0, 0, 1, 1, 1], [0], [0]>} : vector<4x8x8xf32>, vector<4x8x8xf32>, vector<4x8x8xf32> -> vector<4x8x8xf32>
    "tpu.trace_stop"() : () -> ()
    %c2 = arith.constant 2 : index
    %c0_25 = arith.constant 0 : index
    %c0_26 = arith.constant 0 : index
    %c0_27 = arith.constant 0 : index
    %62 = vector.load %arg7[%c2, %c0_25, %c0_26, %c0_27] : memref<3x4x8x8xf32, #tpu.memory_space<vmem>>, vector<1x4x8x8xf32>
    %63 = vector.shape_cast %62 : vector<1x4x8x8xf32> to vector<4x8x8xf32>
    %64 = vector.shape_cast %61 : vector<4x8x8xf32> to vector<1x4x8x8xf32>
    tpu.vector_store %arg7[%c2, %c0_25, %c0_26, %c0_27], %64 {strides = array<i32>} : memref<3x4x8x8xf32, #tpu.memory_space<vmem>>, vector<1x4x8x8xf32>,
    %65 = vector.extract_strided_slice %38 {offsets = [0, 16, 0], sizes = [4, 8, 8], strides = [1, 1, 1]} : vector<4x24x8xf32> to vector<4x8x8xf32>
    %c2_28 = arith.constant 2 : index
    %c0_29 = arith.constant 0 : index
    %c0_30 = arith.constant 0 : index
    %c0_31 = arith.constant 0 : index
    %66 = vector.load %arg8[%c2_28, %c0_29, %c0_30, %c0_31] : memref<3x4x8x8xf32, #tpu.memory_space<vmem>>, vector<1x4x8x8xf32>
    %67 = vector.shape_cast %66 : vector<1x4x8x8xf32> to vector<4x8x8xf32>
    %68 = vector.shape_cast %65 : vector<4x8x8xf32> to vector<1x4x8x8xf32>
    tpu.vector_store %arg8[%c2_28, %c0_29, %c0_30, %c0_31], %68 {strides = array<i32>} : memref<3x4x8x8xf32, #tpu.memory_space<vmem>>, vector<1x4x8x8xf32>,
    %c0_i32 = arith.constant 0 : i32
    %c3_i32 = arith.constant 3 : i32
    %69 = arith.addi %c0_i32, %c3_i32 : i32
    %c1_i32 = arith.constant 1 : i32
    scf.for %arg9 = %c0_i32 to %69 step %c1_i32  : i32 {
      %c1_i32_33 = arith.constant 1 : i32
      %70 = arith.muli %arg9, %c1_i32_33 : i32
      %c0_i32_34 = arith.constant 0 : i32
      %71 = arith.addi %c0_i32_34, %70 : i32
      %c2_i32 = arith.constant 2 : i32
      %72 = arith.cmpi eq, %71, %c2_i32 : i32
      %c1_i32_35 = arith.constant 1 : i32
      %73 = arith.addi %71, %c1_i32_35 : i32
      %c0_i32_36 = arith.constant 0 : i32
      %74 = arith.select %72, %c0_i32_36, %73 : i32
      %c0_i32_37 = arith.constant 0 : i32
      %75 = arith.cmpi eq, %71, %c0_i32_37 : i32
      %c1_i32_38 = arith.constant 1 : i32
      %76 = arith.subi %71, %c1_i32_38 : i32
      %c2_i32_39 = arith.constant 2 : i32
      %77 = arith.select %75, %c2_i32_39, %76 : i32
      %78 = arith.index_cast %74 : i32 to index
      %c0_40 = arith.constant 0 : index
      %c0_41 = arith.constant 0 : index
      %c0_42 = arith.constant 0 : index
      %79 = vector.load %arg7[%78, %c0_40, %c0_41, %c0_42] : memref<3x4x8x8xf32, #tpu.memory_space<vmem>>, vector<1x4x8x8xf32>
      %80 = vector.shape_cast %79 : vector<1x4x8x8xf32> to vector<4x8x8xf32>
      %81 = arith.index_cast %77 : i32 to index
      %c0_43 = arith.constant 0 : index
      %c0_44 = arith.constant 0 : index
      %c0_45 = arith.constant 0 : index
      %82 = vector.load %arg7[%81, %c0_43, %c0_44, %c0_45] : memref<3x4x8x8xf32, #tpu.memory_space<vmem>>, vector<1x4x8x8xf32>
      %83 = vector.shape_cast %82 : vector<1x4x8x8xf32> to vector<4x8x8xf32>
      %84 = arith.addf %80, %83 : vector<4x8x8xf32>
      %cst_46 = arith.constant dense<0xFF800000> : vector<4x8xf32>
      %85 = vector.multi_reduction <maximumf>, %84, %cst_46 [2] : vector<4x8x8xf32> to vector<4x8xf32>
      %86 = vector.shape_cast %85 : vector<4x8xf32> to vector<4x8x1xf32>
      %87 = vector.broadcast %86 : vector<4x8x1xf32> to vector<4x8x8xf32>
      %88 = arith.subf %84, %87 : vector<4x8x8xf32>
      %89 = math.exp %88 : vector<4x8x8xf32>
      %cst_47 = arith.constant dense<0.000000e+00> : vector<4x8xf32>
      %90 = vector.multi_reduction <add>, %89, %cst_47 [2] : vector<4x8x8xf32> to vector<4x8xf32>
      %91 = vector.shape_cast %90 : vector<4x8xf32> to vector<4x8x1xf32>
      %92 = tpu.reciprocal %91 {approx = true} : vector<4x8x1xf32> -> vector<4x8x1xf32>
      %93 = vector.broadcast %92 : vector<4x8x1xf32> to vector<4x8x8xf32>
      %94 = arith.mulf %89, %93 : vector<4x8x8xf32>
      %95 = arith.index_cast %71 : i32 to index
      %c0_48 = arith.constant 0 : index
      %c0_49 = arith.constant 0 : index
      %c0_50 = arith.constant 0 : index
      %96 = vector.load %arg8[%95, %c0_48, %c0_49, %c0_50] : memref<3x4x8x8xf32, #tpu.memory_space<vmem>>, vector<1x4x8x8xf32>
      %97 = vector.shape_cast %96 : vector<1x4x8x8xf32> to vector<4x8x8xf32>
      "tpu.trace_start"() <{level = 10 : i32, message = "hlm,hmd->hld"}> : () -> ()
      %cst_51 = arith.constant dense<0.000000e+00> : vector<4x8x8xf32>
      %98 = tpu.matmul %94, %97, %cst_51 {dimension_numbers = #tpu.dot_dimension_numbers<[2], [1], [1], [2], [0, 0, 0, 1, 1, 2], [0], [0]>} : vector<4x8x8xf32>, vector<4x8x8xf32>, vector<4x8x8xf32> -> vector<4x8x8xf32>
      "tpu.trace_stop"() : () -> ()
      %99 = vector.extract_strided_slice %98 {offsets = [0, 0, 0], sizes = [1, 8, 8], strides = [1, 1, 1]} : vector<4x8x8xf32> to vector<1x8x8xf32>
      %100 = vector.shape_cast %99 : vector<1x8x8xf32> to vector<8x8xf32>
      %101 = vector.extract_strided_slice %98 {offsets = [1, 0, 0], sizes = [1, 8, 8], strides = [1, 1, 1]} : vector<4x8x8xf32> to vector<1x8x8xf32>
      %102 = vector.shape_cast %101 : vector<1x8x8xf32> to vector<8x8xf32>
      %103 = vector.extract_strided_slice %98 {offsets = [2, 0, 0], sizes = [1, 8, 8], strides = [1, 1, 1]} : vector<4x8x8xf32> to vector<1x8x8xf32>
      %104 = vector.shape_cast %103 : vector<1x8x8xf32> to vector<8x8xf32>
      %105 = vector.extract_strided_slice %98 {offsets = [3, 0, 0], sizes = [1, 8, 8], strides = [1, 1, 1]} : vector<4x8x8xf32> to vector<1x8x8xf32>
      %106 = vector.shape_cast %105 : vector<1x8x8xf32> to vector<8x8xf32>
      %107 = tpu.concatenate %100, %102, %104, %106 in 1 : vector<8x8xf32>, vector<8x8xf32>, vector<8x8xf32>, vector<8x8xf32> -> vector<8x32xf32>
      %c0_52 = arith.constant 0 : index
      %c0_53 = arith.constant 0 : index
      %108 = vector.load %arg4[%c0_52, %c0_53] : memref<32x32xf32, #tpu.memory_space<vmem>>, vector<32x32xf32>
      %cst_54 = arith.constant dense<0.000000e+00> : vector<8x32xf32>
      %109 = tpu.matmul %107, %108, %cst_54 {dimension_numbers = #tpu.dot_dimension_numbers<[1], [0], [0], [1], [0, 0, 1, 1], [], []>} : vector<8x32xf32>, vector<32x32xf32>, vector<8x32xf32> -> vector<8x32xf32>
      %c0_55 = arith.constant 0 : index
      %c0_56 = arith.constant 0 : index
      %110 = vector.load %arg5[%c0_55, %c0_56] : memref<1x32xf32, #tpu.memory_space<vmem>>, vector<1x32xf32>
      %111 = vector.broadcast %110 : vector<1x32xf32> to vector<8x32xf32>
      %112 = arith.addf %109, %111 : vector<8x32xf32>
      %c0_57 = arith.constant 0 : index
      %113 = arith.index_cast %71 : i32 to index
      %c0_58 = arith.constant 0 : index
      %c0_59 = arith.constant 0 : index
      %114 = vector.load %arg6[%c0_57, %113, %c0_58, %c0_59] : memref<1x3x8x32xf32, #tpu.memory_space<vmem>>, vector<1x1x8x32xf32>
      %115 = vector.shape_cast %114 : vector<1x1x8x32xf32> to vector<8x32xf32>
      %116 = vector.shape_cast %112 : vector<8x32xf32> to vector<1x1x8x32xf32>
      tpu.vector_store %arg6[%c0_57, %113, %c0_58, %c0_59], %116 {strides = array<i32>} : memref<1x3x8x32xf32, #tpu.memory_space<vmem>>, vector<1x1x8x32xf32>,
    }
    %c3_i32_32 = arith.constant 3 : i32
    return
  }
  func.func @transform_0(%arg0: i32) -> (i32, i32, i32) {
    %c0_i32 = arith.constant 0 : i32
    %c0_i32_0 = arith.constant 0 : i32
    %c0_i32_1 = arith.constant 0 : i32
    return %arg0, %c0_i32, %c0_i32_0 : i32, i32, i32
  }
  func.func @transform_1(%arg0: i32) -> (i32, i32) {
    %c0_i32 = arith.constant 0 : i32
    %c0_i32_0 = arith.constant 0 : i32
    %c0_i32_1 = arith.constant 0 : i32
    return %c0_i32, %c0_i32_0 : i32, i32
  }
  func.func @transform_2(%arg0: i32) -> (i32, i32) {
    %c0_i32 = arith.constant 0 : i32
    %c0_i32_0 = arith.constant 0 : i32
    %c0_i32_1 = arith.constant 0 : i32
    return %c0_i32, %c0_i32_0 : i32, i32
  }
  func.func @transform_3(%arg0: i32) -> (i32, i32) {
    %c0_i32 = arith.constant 0 : i32
    %c0_i32_0 = arith.constant 0 : i32
    %c0_i32_1 = arith.constant 0 : i32
    return %c0_i32, %c0_i32_0 : i32, i32
  }
  func.func @transform_4(%arg0: i32) -> (i32, i32) {
    %c0_i32 = arith.constant 0 : i32
    %c0_i32_0 = arith.constant 0 : i32
    %c0_i32_1 = arith.constant 0 : i32
    return %c0_i32, %c0_i32_0 : i32, i32
  }
  func.func @transform_5(%arg0: i32) -> (i32, i32, i32, i32) {
    %c0_i32 = arith.constant 0 : i32
    %c0_i32_0 = arith.constant 0 : i32
    %c0_i32_1 = arith.constant 0 : i32
    %c0_i32_2 = arith.constant 0 : i32
    return %arg0, %c0_i32, %c0_i32_0, %c0_i32_1 : i32, i32, i32, i32
  }
}

</mosaic_0001>

<llo_original>
// kernel: tpu_custom_call.1
$region0: #{tpu_custom_call.1}
  #allocation0 [shape = 'u32[]', space=smem, size = 0x4, offset = 0x4, fixed_abs, tag = 'smem constant byte address 0x4 - core index']
  #allocation1 [shape = 'u32[144,128]{1,0:T(1,128)}', space=vmem, size = 0x12000, scoped, tag = 'internal scratch']
  #allocation2 [shape = 'f32[3,4,8,8]{3,2,1,0:T(8,128)}', space=vmem, size = 0xc000, scoped, tag = 'scratch operand']
  #allocation3 [shape = 'f32[3,4,8,8]{3,2,1,0:T(8,128)}', space=vmem, size = 0xc000, scoped, tag = 'scratch operand']
  %s0 = inlined_call_operand.hbm [shape: f32[2,24,32], index: 0, kind: input, shape index: {}]
  %s1 = inlined_call_operand.hbm [shape: f32[32,96], index: 1, kind: input, shape index: {}]
  %s2 = inlined_call_operand.hbm [shape: f32[1,96], index: 2, kind: input, shape index: {}]
  %s3 = inlined_call_operand.hbm [shape: f32[32,32], index: 3, kind: input, shape index: {}]
  %s4 = inlined_call_operand.hbm [shape: f32[1,32], index: 4, kind: input, shape index: {}]
  %s5 = inlined_call_operand.hbm [shape: f32[2,3,8,32], index: 5, kind: output, shape index: {}]
  %s6 = sld [smem:[#allocation0]]
  $region80: #{tpu_custom_call.1} parent=0
    _
  %s8 = ssub.s32 1, %s6
  %s9 = scalar_select 0, %s8, %s6
  $region1: #{tpu_custom_call.1} parent=0
    #allocation4 [shape = 'u8[24576]{0}', space=vmem, size = 0x6000, scoped, tag = 'input window, operand 0']
    #allocation5 [shape = 's32[2]{0}', space=sflag, size = 0x8, scoped, tag = 'scoped memory for tpu_custom_call.1']
    #allocation6 [shape = 's32[2]{0}', space=sflag, size = 0x8, scoped, tag = 'scoped memory for tpu_custom_call.1']
    #allocation7 [shape = 'u8[16384]{0}', space=vmem, size = 0x4000, scoped, tag = 'input window, operand 1, single buffered']
    #allocation8 [shape = 's32[1]{0}', space=sflag, size = 0x4, scoped, tag = 'scoped memory for tpu_custom_call.1']
    #allocation9 [shape = 'u8[512]{0}', space=vmem, size = 0x400, scoped, tag = 'input window, operand 2, single buffered']
    #allocation10 [shape = 'u8[16384]{0}', space=vmem, size = 0x4000, scoped, tag = 'input window, operand 3, single buffered']
    #allocation11 [shape = 's32[1]{0}', space=sflag, size = 0x4, scoped, tag = 'scoped memory for tpu_custom_call.1']
    #allocation12 [shape = 'u8[512]{0}', space=vmem, size = 0x400, scoped, tag = 'input window, operand 4, single buffered']
    #allocation13 [shape = 'u8[24576]{0}', space=vmem, size = 0x6000, scoped, tag = 'output window, operand 0']
    %10 = vsyncpa [#allocation5], 0
    %s11 = scalar_lea.sflag [#allocation5], 1
    %12 = vsyncpa %s11, 0
    %13 = vsyncpa [#allocation8], 0
    %14 = vsyncpa [#allocation11], 0
    %15 = vsyncpa [#allocation6], 0
    %s16 = scalar_lea.sflag [#allocation6], 1
    %17 = vsyncpa %s16, 0
    loop: start=0, step=1, limit=4
    $region2: #{tpu_custom_call.1} parent=1 // loop_pre_header
      _
    $region3: #{tpu_custom_call.1} parent=1 // loop_header
      %s19 = sphi 0, %s23
      %p20 = scmp.ge.s32.totalorder %s19, 4
      %s29 = sphi 0, %s31
      %s32 = sphi 0, %s29
      %s33 = sphi 0, %s32
      %s49 = sphi 0, %s33
      %s53 = sphi 0, %s53
      %s55 = sphi 0, %s53
      %s56 = sphi 0, %s55
      %s70 = sphi 0, %s56
      %s74 = sphi 0, %s74
      %s76 = sphi 0, %s74
      %s77 = sphi 0, %s76
      %s91 = sphi 0, %s77
      %s95 = sphi 0, %s95
      %s97 = sphi 0, %s95
      %s98 = sphi 0, %s97
      %s112 = sphi 0, %s98
      %s116 = sphi 0, %s116
      %s118 = sphi 0, %s116
      %s119 = sphi 0, %s118
      %s133 = sphi 0, %s119
      %s139 = sphi 0, %s141
      %s142 = sphi 0, %s139
      %s143 = sphi 0, %s142
      %s159 = sphi 0, %s143
    $region4: #{tpu_custom_call.1} parent=1 // loop_header_branch
      %22 = sbr.rel (%p20) target = $region8
    $region5: #{tpu_custom_call.1} parent=1 // loop_body
      %s24 = ssub.s32 %s19, 1
      %s25 = ssub.s32 %s19, 2
      %s26 = sadd.s32 %s19, 1
      %s27 = ssub.s32 %s19, %s26
      %p28 = scmp.eq.s32.totalorder %s27, 0
      %s30 = sadd.s32 %s29, 1
      %s31 = scalar_select %p28, %s29, %s30
      %p34 = pneg %p28
      %p35 = scmp.eq.s32.totalorder %s19, 1
      %p36 = por %p34, %p35
      %p37 = scmp.ne.s32.totalorder %s29, %s32
      %p38 = scmp.eq.s32.totalorder %s19, 0
      %p39 = por %p37, %p38
      %p40 = scmp.ne.s32.totalorder %s29, %s32
      %p41 = scmp.eq.s32.totalorder %s24, 1
      %p42 = por %p40, %p41
      %p43 = scmp.ne.s32.totalorder %s32, %s33
      %p44 = scmp.eq.s32.totalorder %s24, 0
      %p45 = por %p43, %p44
      %p46 = scmp.ne.s32.totalorder %s32, %s33
      %p47 = scmp.eq.s32.totalorder %s25, 1
      %p48 = por %p46, %p47
      %p50 = scmp.ne.s32.totalorder %s33, %s49
      %p51 = scmp.eq.s32.totalorder %s25, 0
      %p52 = por %p50, %p51
      %s54 = sadd.s32 %s53, 1
      %p57 = scmp.eq.s32.totalorder %s19, 1
      %p58 = scmp.ne.s32.totalorder %s53, %s55
      %p59 = scmp.eq.s32.totalorder %s19, 0
      %p60 = por %p58, %p59
      %p61 = scmp.ne.s32.totalorder %s53, %s55
      %p62 = scmp.eq.s32.totalorder %s24, 1
      %p63 = por %p61, %p62
      %p64 = scmp.ne.s32.totalorder %s55, %s56
      %p65 = scmp.eq.s32.totalorder %s24, 0
      %p66 = por %p64, %p65
      %p67 = scmp.ne.s32.totalorder %s55, %s56
      %p68 = scmp.eq.s32.totalorder %s25, 1
      %p69 = por %p67, %p68
      %p71 = scmp.ne.s32.totalorder %s56, %s70
      %p72 = scmp.eq.s32.totalorder %s25, 0
      %p73 = por %p71, %p72
      %s75 = sadd.s32 %s74, 1
      %p78 = scmp.eq.s32.totalorder %s19, 1
      %p79 = scmp.ne.s32.totalorder %s74, %s76
      %p80 = scmp.eq.s32.totalorder %s19, 0
      %p81 = por %p79, %p80
      %p82 = scmp.ne.s32.totalorder %s74, %s76
      %p83 = scmp.eq.s32.totalorder %s24, 1
      %p84 = por %p82, %p83
      %p85 = scmp.ne.s32.totalorder %s76, %s77
      %p86 = scmp.eq.s32.totalorder %s24, 0
      %p87 = por %p85, %p86
      %p88 = scmp.ne.s32.totalorder %s76, %s77
      %p89 = scmp.eq.s32.totalorder %s25, 1
      %p90 = por %p88, %p89
      %p92 = scmp.ne.s32.totalorder %s77, %s91
      %p93 = scmp.eq.s32.totalorder %s25, 0
      %p94 = por %p92, %p93
      %s96 = sadd.s32 %s95, 1
      %p99 = scmp.eq.s32.totalorder %s19, 1
      %p100 = scmp.ne.s32.totalorder %s95, %s97
      %p101 = scmp.eq.s32.totalorder %s19, 0
      %p102 = por %p100, %p101
      %p103 = scmp.ne.s32.totalorder %s95, %s97
      %p104 = scmp.eq.s32.totalorder %s24, 1
      %p105 = por %p103, %p104
      %p106 = scmp.ne.s32.totalorder %s97, %s98
      %p107 = scmp.eq.s32.totalorder %s24, 0
      %p108 = por %p106, %p107
      %p109 = scmp.ne.s32.totalorder %s97, %s98
      %p110 = scmp.eq.s32.totalorder %s25, 1
      %p111 = por %p109, %p110
      %p113 = scmp.ne.s32.totalorder %s98, %s112
      %p114 = scmp.eq.s32.totalorder %s25, 0
      %p115 = por %p113, %p114
      %s117 = sadd.s32 %s116, 1
      %p120 = scmp.eq.s32.totalorder %s19, 1
      %p121 = scmp.ne.s32.totalorder %s116, %s118
      %p122 = scmp.eq.s32.totalorder %s19, 0
      %p123 = por %p121, %p122
      %p124 = scmp.ne.s32.totalorder %s116, %s118
      %p125 = scmp.eq.s32.totalorder %s24, 1
      %p126 = por %p124, %p125
      %p127 = scmp.ne.s32.totalorder %s118, %s119
      %p128 = scmp.eq.s32.totalorder %s24, 0
      %p129 = por %p127, %p128
      %p130 = scmp.ne.s32.totalorder %s118, %s119
      %p131 = scmp.eq.s32.totalorder %s25, 1
      %p132 = por %p130, %p131
      %p134 = scmp.ne.s32.totalorder %s119, %s133
      %p135 = scmp.eq.s32.totalorder %s25, 0
      %p136 = por %p134, %p135
      %s137 = ssub.s32 %s19, %s26
      %p138 = scmp.eq.s32.totalorder %s137, 0
      %s140 = sadd.s32 %s139, 1
      %s141 = scalar_select %p138, %s139, %s140
      %p144 = pneg %p138
      %p145 = scmp.eq.s32.totalorder %s19, 1
      %p146 = por %p144, %p145
      %p147 = scmp.ne.s32.totalorder %s139, %s142
      %p148 = scmp.eq.s32.totalorder %s19, 0
      %p149 = por %p147, %p148
      %p150 = scmp.ne.s32.totalorder %s139, %s142
      %p151 = scmp.eq.s32.totalorder %s24, 1
      %p152 = por %p150, %p151
      %p153 = scmp.ne.s32.totalorder %s142, %s143
      %p154 = scmp.eq.s32.totalorder %s24, 0
      %p155 = por %p153, %p154
      %p156 = scmp.ne.s32.totalorder %s142, %s143
      %p157 = scmp.eq.s32.totalorder %s25, 1
      %p158 = por %p156, %p157
      %p160 = scmp.ne.s32.totalorder %s143, %s159
      %p161 = scmp.eq.s32.totalorder %s25, 0
      %p162 = por %p160, %p161
      %p163 = scmp.le.s32.totalorder 1, %s19
      %p164 = scmp.lt.s32.totalorder %s19, 3
      %p165 = pnand %p163, %p164
      %p166 = pneg %p165
      // Predicated region
      $region9: #{tpu_custom_call.1} parent=5 // pred_check
        _
      $region10: #{tpu_custom_call.1} parent=5 // pred_check_branch
        %168 = sbr.rel (%p165) target = $region12
      $region11: #{tpu_custom_call.1} parent=5 // pred_region
        %s169 = ssub.s32 %s19, 1
        // Predicated region
        $region13: #{tpu_custom_call.1} parent=11 // pred_check
          %p170 = pneg %p66
        $region14: #{tpu_custom_call.1} parent=11 // pred_check_branch
          %172 = sbr.rel (%p170) target = $region16
        $region15: #{tpu_custom_call.1} parent=11 // pred_region
          %s174 = ssub.s32 512, 512
          %175 = vsyncadd [#allocation8], %s174
          %s176 = sshll.u32 [#allocation7], 4
          %s177 = int_to_ptr.vmem [resolvable:$true] %s176
          %182 = dma.hbm_to_vmem [thread:$0]  %s1, 512, %s177, [#allocation8], 128, 128, 8
        $region16: #{tpu_custom_call.1} parent=11 // pred_fallthru
          _
        // Predicated region
        $region17: #{tpu_custom_call.1} parent=11 // pred_check
          %p183 = pneg %p87
        $region18: #{tpu_custom_call.1} parent=11 // pred_check_branch
          %185 = sbr.rel (%p183) target = $region20
        $region19: #{tpu_custom_call.1} parent=11 // pred_region
          %s187 = ssub.s32 16, 16
          %188 = vsyncadd [#allocation8], %s187
          %s190 = sshll.u32 [#allocation9], 4
          %s191 = int_to_ptr.vmem [resolvable:$true] %s190
          %193 = dma.hbm_to_vmem [thread:$0]  %s2, 16, %s191, [#allocation8]
        $region20: #{tpu_custom_call.1} parent=11 // pred_fallthru
          _
        // Predicated region
        $region21: #{tpu_custom_call.1} parent=11 // pred_check
          %p194 = pneg %p108
        $region22: #{tpu_custom_call.1} parent=11 // pred_check_branch
          %196 = sbr.rel (%p194) target = $region24
        $region23: #{tpu_custom_call.1} parent=11 // pred_region
          %s198 = ssub.s32 512, 512
          %199 = vsyncadd [#allocation11], %s198
          %s200 = sshll.u32 [#allocation10], 4
          %s201 = int_to_ptr.vmem [resolvable:$true] %s200
          %206 = dma.hbm_to_vmem [thread:$0]  %s3, 512, %s201, [#allocation11], 128, 128, 8
        $region24: #{tpu_custom_call.1} parent=11 // pred_fallthru
          _
        // Predicated region
        $region25: #{tpu_custom_call.1} parent=11 // pred_check
          %p207 = pneg %p129
        $region26: #{tpu_custom_call.1} parent=11 // pred_check_branch
          %209 = sbr.rel (%p207) target = $region28
        $region27: #{tpu_custom_call.1} parent=11 // pred_region
          %s211 = ssub.s32 16, 16
          %212 = vsyncadd [#allocation11], %s211
          %s214 = sshll.u32 [#allocation12], 4
          %s215 = int_to_ptr.vmem [resolvable:$true] %s214
          %217 = dma.hbm_to_vmem [thread:$0]  %s4, 16, %s215, [#allocation11]
        $region28: #{tpu_custom_call.1} parent=11 // pred_fallthru
          _
      $region12: #{tpu_custom_call.1} parent=5 // pred_fallthru
        _
      %p218 = scmp.lt.s32.totalorder %s19, 2
      // Predicated region
      $region29: #{tpu_custom_call.1} parent=5 // pred_check
        %p219 = pneg %p218
      $region30: #{tpu_custom_call.1} parent=5 // pred_check_branch
        %221 = sbr.rel (%p219) target = $region32
      $region31: #{tpu_custom_call.1} parent=5 // pred_region
        // Predicated region
        $region33: #{tpu_custom_call.1} parent=31 // pred_check
          %p222 = pneg %p39
        $region34: #{tpu_custom_call.1} parent=31 // pred_check_branch
          %224 = sbr.rel (%p222) target = $region36
        $region35: #{tpu_custom_call.1} parent=31 // pred_region
          %s225 = sand.u32 %s29, 1
          %s226 = scalar_lea.sflag [#allocation5], %s225
          %s227 = sand.u32 %s29, 1
          %s228 = smul.addr %s227, 24
          %s229 = scalar_lea.vmem [#allocation4], %s228
          %s231 = ssub.s32 384, 384
          %232 = vsyncadd %s226, %s231
          %s233 = smul.addr %s19, 3
          %s234 = smul.addr %s233, 128
          %s235 = scalar_lea.hbm %s0, %s234
          %s236 = sshll.u32 %s229, 4
          %s237 = int_to_ptr.vmem [resolvable:$true] %s236
          %242 = dma.hbm_to_vmem [thread:$0]  %s235, 384, %s237, %s226, 128, 128, 8
        $region36: #{tpu_custom_call.1} parent=31 // pred_fallthru
          _
      $region32: #{tpu_custom_call.1} parent=5 // pred_fallthru
        _
      %p243 = scmp.le.s32.totalorder 1, %s19
      %p244 = scmp.lt.s32.totalorder %s19, 3
      %p245 = pnand %p243, %p244
      %p246 = pneg %p245
      // Predicated region
      $region37: #{tpu_custom_call.1} parent=5 // pred_check
        _
      $region38: #{tpu_custom_call.1} parent=5 // pred_check_branch
        %248 = sbr.rel (%p245) target = $region40
      $region39: #{tpu_custom_call.1} parent=5 // pred_region
        %s249 = ssub.s32 %s19, 1
        %s250 = sand.u32 %s32, 1
        %s251 = scalar_lea.sflag [#allocation5], %s250
        %s252 = sand.u32 %s32, 1
        %s253 = smul.addr %s252, 24
        %s254 = scalar_lea.vmem [#allocation4], %s253
        // Predicated region
        $region41: #{tpu_custom_call.1} parent=39 // pred_check
          %p255 = pneg %p45
        $region42: #{tpu_custom_call.1} parent=39 // pred_check_branch
          %257 = sbr.rel (%p255) target = $region44
        $region43: #{tpu_custom_call.1} parent=39 // pred_region
          %258 = dma.done %s251, 384
        $region44: #{tpu_custom_call.1} parent=39 // pred_fallthru
          _
        // Predicated region
        $region45: #{tpu_custom_call.1} parent=39 // pred_check
          %p259 = pneg %p66
        $region46: #{tpu_custom_call.1} parent=39 // pred_check_branch
          %261 = sbr.rel (%p259) target = $region48
        $region47: #{tpu_custom_call.1} parent=39 // pred_region
          %262 = dma.done [#allocation8], 512
        $region48: #{tpu_custom_call.1} parent=39 // pred_fallthru
          _
        // Predicated region
        $region49: #{tpu_custom_call.1} parent=39 // pred_check
          %p263 = pneg %p87
        $region50: #{tpu_custom_call.1} parent=39 // pred_check_branch
          %265 = sbr.rel (%p263) target = $region52
        $region51: #{tpu_custom_call.1} parent=39 // pred_region
          %266 = dma.done [#allocation8], 16
        $region52: #{tpu_custom_call.1} parent=39 // pred_fallthru
          _
        // Predicated region
        $region53: #{tpu_custom_call.1} parent=39 // pred_check
          %p267 = pneg %p108
        $region54: #{tpu_custom_call.1} parent=39 // pred_check_branch
          %269 = sbr.rel (%p267) target = $region56
        $region55: #{tpu_custom_call.1} parent=39 // pred_region
          %270 = dma.done [#allocation11], 512
        $region56: #{tpu_custom_call.1} parent=39 // pred_fallthru
          _
        // Predicated region
        $region57: #{tpu_custom_call.1} parent=39 // pred_check
          %p271 = pneg %p129
        $region58: #{tpu_custom_call.1} parent=39 // pred_check_branch
          %273 = sbr.rel (%p271) target = $region60
        $region59: #{tpu_custom_call.1} parent=39 // pred_region
          %274 = dma.done [#allocation11], 16
        $region60: #{tpu_custom_call.1} parent=39 // pred_fallthru
          _
        %s275 = sand.u32 %s32, 1
        %s276 = scalar_lea.sflag [#allocation5], %s275
        %s277 = sand.u32 %s32, 1
        %s278 = smul.addr %s277, 24
        %s279 = scalar_lea.vmem [#allocation4], %s278
        %p280 = pneg %p45
        %p281 = pneg %p42
        %p282 = pneg %p66
        %p283 = pneg %p63
        %p284 = pneg %p87
        %p285 = pneg %p84
        %p286 = pneg %p108
        %p287 = pneg %p105
        %p288 = pneg %p129
        %p289 = pneg %p126
        %p290 = pneg %p155
        %p291 = pneg %p152
        %s292 = sand.u32 %s142, 1
        %s293 = scalar_lea.sflag [#allocation6], %s292
        %s294 = sand.u32 %s142, 1
        %s295 = smul.addr %s294, 24
        %s296 = scalar_lea.vmem [#allocation13], %s295
        %v297 = vld [vmem:[#allocation7] sm:$0xff]
        %v298 = vld [vmem:[#allocation7 + $0x8] sm:$0xff]
        %v299 = vld [vmem:[#allocation7 + $0x10] sm:$0xff]
        %v300 = vld [vmem:[#allocation7 + $0x18] sm:$0xff]
        %v301 = vld [vmem:[#allocation9] sm:$0x1]
        %v302 = vld [vmem:[%s254] sm:$0xff]
        %v303 = vld [vmem:[%s254 + $0x8] sm:$0xff]
        %v304 = vld [vmem:[%s254 + $0x10] sm:$0xff]
        %v306 = vlaneseq
        %v307 = vshrl.u32 %v306, 7
        %v308 = vsub.s32 0, %v307
        %v309 = vrot.slane %v301, %v308
        %vm311 = vcmask 261120
        %v313 = vsel %vm311, %v302, 0
        %v316 = vsel %vm311, %v303, 0
        %v319 = vsel %vm311, %v304, 0
        %321 = vmatprep.subr.mxu0 0.0
        %322 = vmatpush1.msra.mxu0 %v297
        %323 = vmatprep.subr.mxu0 0.0
        %324 = vmatpush1.msra.mxu0 %v298
        %325 = vmatprep.subr.mxu0 0.0
        %326 = vmatpush1.msra.mxu0 %v299
        %327 = vmatprep.subr.mxu0 0.0
        %328 = vmatpush1.msra.mxu0 %v300
        %329 = vmatprep.subr.mxu0 0.0
        %330 = vmatpush1.msra.mxu0 0.0
        %331 = vmatprep.subr.mxu0 0.0
        %332 = vmatpush1.msra.mxu0 0.0
        %333 = vmatprep.subr.mxu0 0.0
        %334 = vmatpush1.msra.mxu0 0.0
        %335 = vmatprep.subr.mxu0 0.0
        %336 = vmatpush1.msra.mxu0 0.0
        %337 = vmatprep.subr.mxu0 0.0
        %338 = vmatpush1.msra.mxu0 0.0
        %339 = vmatprep.subr.mxu0 0.0
        %340 = vmatpush1.msra.mxu0 0.0
        %341 = vmatprep.subr.mxu0 0.0
        %342 = vmatpush1.msra.mxu0 0.0
        %343 = vmatprep.subr.mxu0 0.0
        %344 = vmatpush1.msra.mxu0 0.0
        %345 = vmatprep.subr.mxu0 0.0
        %346 = vmatpush1.msra.mxu0 0.0
        %347 = vmatprep.subr.mxu0 0.0
        %348 = vmatpush1.msra.mxu0 0.0
        %349 = vmatprep.subr.mxu0 0.0
        %350 = vmatpush1.msra.mxu0 0.0
        %351 = vmatprep.subr.mxu0 0.0
        %352 = vmatpush1.msra.mxu0 0.0
        %353 = vmatprep.subr.mxu0 0.0
        %354 = vmatpush1.msra.mxu0 0.0
        %355 = vmatprep.subr.mxu0 0.0
        %356 = vmatpush1.msra.mxu0 0.0
        %357 = vmatprep.subr.mxu0 0.0
        %358 = vmatpush1.msra.mxu0 0.0
        %359 = vmatprep.subr.mxu0 0.0
        %360 = vmatpush1.msra.mxu0 0.0
        %361 = vmatprep.subr.mxu0 0.0
        %362 = vmatpush1.msra.mxu0 0.0
        %363 = vmatprep.subr.mxu0 0.0
        %364 = vmatpush1.msra.mxu0 0.0
        %365 = vmatprep.subr.mxu0 0.0
        %366 = vmatpush1.msra.mxu0 0.0
        %367 = vmatprep.subr.mxu0 0.0
        %368 = vmatpush1.msra.mxu0 0.0
        %369 = vmatprep.subr.mxu0 0.0
        %370 = vmatpush1.msra.mxu0 0.0
        %371 = vmatprep.subr.mxu0 0.0
        %372 = vmatpush1.msra.mxu0 0.0
        %373 = vmatprep.subr.mxu0 0.0
        %374 = vmatpush1.msra.mxu0 0.0
        %375 = vmatprep.subr.mxu0 0.0
        %376 = vmatpush1.msra.mxu0 0.0
        %377 = vmatprep.subr.mxu0 0.0
        %378 = vmatpush1.msra.mxu0 0.0
        %379 = vmatprep.subr.mxu0 0.0
        %380 = vmatpush1.msra.mxu0 0.0
        %381 = vmatprep.subr.mxu0 0.0
        %382 = vmatpush1.msra.mxu0 0.0
        %383 = vmatprep.subr.mxu0 0.0
        %384 = vmatpush1.msra.mxu0 0.0
        %385 = vmatprep.mubr.f32.mxu0 0.0
        %386 = vmatmul.mubr.f32.gmra.mrb[0].mxu0 %v313
        %v387 = vpop.f32.mrb[0].mxu0
        %v388 = vadd.f32 %v309, %v387
        %v389 = vpop.f32.mrb[0].mxu0
        %390 = vmatprep.mubr.f32.mxu0 0.0
        %391 = vmatmul.mubr.f32.gmra.mrb[0].mxu0 %v316
        %v392 = vpop.f32.mrb[0].mxu0
        %v393 = vadd.f32 %v309, %v392
        %v394 = vpop.f32.mrb[0].mxu0
        %395 = vmatprep.mubr.f32.mxu0 0.0
        %396 = vmatmul.mubr.f32.gmra.mrb[0].mxu0 %v319
        %v397 = vpop.f32.mrb[0].mxu0
        %v398 = vadd.f32 %v309, %v397
        %v399 = vpop.f32.mrb[0].mxu0
        %400 = vdwg.mxu0
        %v401 = vmul.f32 %v388, 0.17677669
        %v402 = vmul.f32 %v393, 0.17677669
        %v403 = vmul.f32 %v398, 0.17677669
        %407 = vrot.lane.b32.xlu0 %v401, 120
        %v408 = vpop.permute.xlu0 %407
        %409 = vrot.lane.b32.xlu0 %v402, 120
        %v410 = vpop.permute.xlu0 %409
        %411 = vrot.lane.b32.xlu0 %v403, 120
        %v412 = vpop.permute.xlu0 %411
        %413 = vrot.lane.b32.xlu0 %v401, 112
        %v414 = vpop.permute.xlu0 %413
        %415 = vrot.lane.b32.xlu0 %v402, 112
        %v416 = vpop.permute.xlu0 %415
        %417 = vrot.lane.b32.xlu0 %v403, 112
        %v418 = vpop.permute.xlu0 %417
        %419 = vrot.lane.b32.xlu0 %v401, 104
        %v420 = vpop.permute.xlu0 %419
        %421 = vrot.lane.b32.xlu0 %v402, 104
        %v422 = vpop.permute.xlu0 %421
        %423 = vrot.lane.b32.xlu0 %v403, 104
        %v424 = vpop.permute.xlu0 %423
        %428 = vrot.lane.b32.xlu0 %v388, 120
        %v429 = vpop.permute.xlu0 %428
        %430 = vrot.lane.b32.xlu0 %v393, 120
        %v431 = vpop.permute.xlu0 %430
        %432 = vrot.lane.b32.xlu0 %v398, 120
        %v433 = vpop.permute.xlu0 %432
        %434 = vrot.lane.b32.xlu0 %v388, 112
        %v435 = vpop.permute.xlu0 %434
        %436 = vrot.lane.b32.xlu0 %v393, 112
        %v437 = vpop.permute.xlu0 %436
        %438 = vrot.lane.b32.xlu0 %v398, 112
        %v439 = vpop.permute.xlu0 %438
        %440 = vrot.lane.b32.xlu0 %v388, 104
        %v441 = vpop.permute.xlu0 %440
        %442 = vrot.lane.b32.xlu0 %v393, 104
        %v443 = vpop.permute.xlu0 %442
        %444 = vrot.lane.b32.xlu0 %v398, 104
        %v445 = vpop.permute.xlu0 %444
        %446 = vrot.lane.b32.xlu0 %v388, 96
        %v447 = vpop.permute.xlu0 %446
        %vm448 = vcmask 64512
        %v449 = vsel %vm448, %v401, 0
        %v451 = vsel %vm448, %v447, 0
        %453 = vmatprep.subr.mxu0 0.0
        %454 = vmatpush1.xpose.msra.mxu0 %v451
        %455 = vmatprep.subr.mxu0 0.0
        %456 = vmatpush1.xpose.msra.mxu0 0.0
        %457 = vmatprep.subr.mxu0 0.0
        %458 = vmatpush1.xpose.msra.mxu0 0.0
        %459 = vmatprep.subr.mxu0 0.0
        %460 = vmatpush1.xpose.msra.mxu0 0.0
        %461 = vmatprep.subr.mxu0 0.0
        %462 = vmatpush1.xpose.msra.mxu0 0.0
        %463 = vmatprep.subr.mxu0 0.0
        %464 = vmatpush1.xpose.msra.mxu0 0.0
        %465 = vmatprep.subr.mxu0 0.0
        %466 = vmatpush1.xpose.msra.mxu0 0.0
        %467 = vmatprep.subr.mxu0 0.0
        %468 = vmatpush1.xpose.msra.mxu0 0.0
        %469 = vmatprep.subr.mxu0 0.0
        %470 = vmatpush1.xpose.msra.mxu0 0.0
        %471 = vmatprep.subr.mxu0 0.0
        %472 = vmatpush1.xpose.msra.mxu0 0.0
        %473 = vmatprep.subr.mxu0 0.0
        %474 = vmatpush1.xpose.msra.mxu0 0.0
        %475 = vmatprep.subr.mxu0 0.0
        %476 = vmatpush1.xpose.msra.mxu0 0.0
        %477 = vmatprep.subr.mxu0 0.0
        %478 = vmatpush1.xpose.msra.mxu0 0.0
        %479 = vmatprep.subr.mxu0 0.0
        %480 = vmatpush1.xpose.msra.mxu0 0.0
        %481 = vmatprep.subr.mxu0 0.0
        %482 = vmatpush1.xpose.msra.mxu0 0.0
        %483 = vmatprep.subr.mxu0 0.0
        %484 = vmatpush1.xpose.msra.mxu0 0.0
        %485 = vmatprep.subr.mxu0 0.0
        %486 = vmatpush1.xpose.msra.mxu0 0.0
        %487 = vmatprep.subr.mxu0 0.0
        %488 = vmatpush1.xpose.msra.mxu0 0.0
        %489 = vmatprep.subr.mxu0 0.0
        %490 = vmatpush1.xpose.msra.mxu0 0.0
        %491 = vmatprep.subr.mxu0 0.0
        %492 = vmatpush1.xpose.msra.mxu0 0.0
        %493 = vmatprep.subr.mxu0 0.0
        %494 = vmatpush1.xpose.msra.mxu0 0.0
        %495 = vmatprep.subr.mxu0 0.0
        %496 = vmatpush1.xpose.msra.mxu0 0.0
        %497 = vmatprep.subr.mxu0 0.0
        %498 = vmatpush1.xpose.msra.mxu0 0.0
        %499 = vmatprep.subr.mxu0 0.0
        %500 = vmatpush1.xpose.msra.mxu0 0.0
        %501 = vmatprep.subr.mxu0 0.0
        %502 = vmatpush1.xpose.msra.mxu0 0.0
        %503 = vmatprep.subr.mxu0 0.0
        %504 = vmatpush1.xpose.msra.mxu0 0.0
        %505 = vmatprep.subr.mxu0 0.0
        %506 = vmatpush1.xpose.msra.mxu0 0.0
        %507 = vmatprep.subr.mxu0 0.0
        %508 = vmatpush1.xpose.msra.mxu0 0.0
        %509 = vmatprep.subr.mxu0 0.0
        %510 = vmatpush1.xpose.msra.mxu0 0.0
        %511 = vmatprep.subr.mxu0 0.0
        %512 = vmatpush1.xpose.msra.mxu0 0.0
        %513 = vmatprep.subr.mxu0 0.0
        %514 = vmatpush1.xpose.msra.mxu0 0.0
        %515 = vmatprep.subr.mxu0 0.0
        %516 = vmatpush1.xpose.msra.mxu0 0.0
        %517 = vmatprep.mubr.f32.mxu0 0.0
        %518 = vmatmul.mubr.f32.gmra.mrb[0].mxu0 %v449
        %v519 = vpop.f32.mrb[0].mxu0
        %v520 = vadd.f32 0.0, %v519
        %v521 = vpop.f32.mrb[0].mxu0
        %522 = vdwg.mxu0
        %523 = vrot.lane.b32.xlu0 %v429, 96
        %v524 = vpop.permute.xlu0 %523
        %v525 = vsel %vm448, %v408, 0
        %v527 = vsel %vm448, %v524, 0
        %529 = vmatprep.subr.mxu0 0.0
        %530 = vmatpush1.xpose.msra.mxu0 %v527
        %531 = vmatprep.subr.mxu0 0.0
        %532 = vmatpush1.xpose.msra.mxu0 0.0
        %533 = vmatprep.subr.mxu0 0.0
        %534 = vmatpush1.xpose.msra.mxu0 0.0
        %535 = vmatprep.subr.mxu0 0.0
        %536 = vmatpush1.xpose.msra.mxu0 0.0
        %537 = vmatprep.subr.mxu0 0.0
        %538 = vmatpush1.xpose.msra.mxu0 0.0
        %539 = vmatprep.subr.mxu0 0.0
        %540 = vmatpush1.xpose.msra.mxu0 0.0
        %541 = vmatprep.subr.mxu0 0.0
        %542 = vmatpush1.xpose.msra.mxu0 0.0
        %543 = vmatprep.subr.mxu0 0.0
        %544 = vmatpush1.xpose.msra.mxu0 0.0
        %545 = vmatprep.subr.mxu0 0.0
        %546 = vmatpush1.xpose.msra.mxu0 0.0
        %547 = vmatprep.subr.mxu0 0.0
        %548 = vmatpush1.xpose.msra.mxu0 0.0
        %549 = vmatprep.subr.mxu0 0.0
        %550 = vmatpush1.xpose.msra.mxu0 0.0
        %551 = vmatprep.subr.mxu0 0.0
        %552 = vmatpush1.xpose.msra.mxu0 0.0
        %553 = vmatprep.subr.mxu0 0.0
        %554 = vmatpush1.xpose.msra.mxu0 0.0
        %555 = vmatprep.subr.mxu0 0.0
        %556 = vmatpush1.xpose.msra.mxu0 0.0
        %557 = vmatprep.subr.mxu0 0.0
        %558 = vmatpush1.xpose.msra.mxu0 0.0
        %559 = vmatprep.subr.mxu0 0.0
        %560 = vmatpush1.xpose.msra.mxu0 0.0
        %561 = vmatprep.subr.mxu0 0.0
        %562 = vmatpush1.xpose.msra.mxu0 0.0
        %563 = vmatprep.subr.mxu0 0.0
        %564 = vmatpush1.xpose.msra.mxu0 0.0
        %565 = vmatprep.subr.mxu0 0.0
        %566 = vmatpush1.xpose.msra.mxu0 0.0
        %567 = vmatprep.subr.mxu0 0.0
        %568 = vmatpush1.xpose.msra.mxu0 0.0
        %569 = vmatprep.subr.mxu0 0.0
        %570 = vmatpush1.xpose.msra.mxu0 0.0
        %571 = vmatprep.subr.mxu0 0.0
        %572 = vmatpush1.xpose.msra.mxu0 0.0
        %573 = vmatprep.subr.mxu0 0.0
        %574 = vmatpush1.xpose.msra.mxu0 0.0
        %575 = vmatprep.subr.mxu0 0.0
        %576 = vmatpush1.xpose.msra.mxu0 0.0
        %577 = vmatprep.subr.mxu0 0.0
        %578 = vmatpush1.xpose.msra.mxu0 0.0
        %579 = vmatprep.subr.mxu0 0.0
        %580 = vmatpush1.xpose.msra.mxu0 0.0
        %581 = vmatprep.subr.mxu0 0.0
        %582 = vmatpush1.xpose.msra.mxu0 0.0
        %583 = vmatprep.subr.mxu0 0.0
        %584 = vmatpush1.xpose.msra.mxu0 0.0
        %585 = vmatprep.subr.mxu0 0.0
        %586 = vmatpush1.xpose.msra.mxu0 0.0
        %587 = vmatprep.subr.mxu0 0.0
        %588 = vmatpush1.xpose.msra.mxu0 0.0
        %589 = vmatprep.subr.mxu0 0.0
        %590 = vmatpush1.xpose.msra.mxu0 0.0
        %591 = vmatprep.subr.mxu0 0.0
        %592 = vmatpush1.xpose.msra.mxu0 0.0
        %593 = vmatprep.mubr.f32.mxu0 0.0
        %594 = vmatmul.mubr.f32.gmra.mrb[0].mxu0 %v525
        %v595 = vpop.f32.mrb[0].mxu0
        %v596 = vadd.f32 0.0, %v595
        %v597 = vpop.f32.mrb[0].mxu0
        %598 = vdwg.mxu0
        %599 = vrot.lane.b32.xlu0 %v435, 96
        %v600 = vpop.permute.xlu0 %599
        %v601 = vsel %vm448, %v414, 0
        %v603 = vsel %vm448, %v600, 0
        %605 = vmatprep.subr.mxu0 0.0
        %606 = vmatpush1.xpose.msra.mxu0 %v603
        %607 = vmatprep.subr.mxu0 0.0
        %608 = vmatpush1.xpose.msra.mxu0 0.0
        %609 = vmatprep.subr.mxu0 0.0
        %610 = vmatpush1.xpose.msra.mxu0 0.0
        %611 = vmatprep.subr.mxu0 0.0
        %612 = vmatpush1.xpose.msra.mxu0 0.0
        %613 = vmatprep.subr.mxu0 0.0
        %614 = vmatpush1.xpose.msra.mxu0 0.0
        %615 = vmatprep.subr.mxu0 0.0
        %616 = vmatpush1.xpose.msra.mxu0 0.0
        %617 = vmatprep.subr.mxu0 0.0
        %618 = vmatpush1.xpose.msra.mxu0 0.0
        %619 = vmatprep.subr.mxu0 0.0
        %620 = vmatpush1.xpose.msra.mxu0 0.0
        %621 = vmatprep.subr.mxu0 0.0
        %622 = vmatpush1.xpose.msra.mxu0 0.0
        %623 = vmatprep.subr.mxu0 0.0
        %624 = vmatpush1.xpose.msra.mxu0 0.0
        %625 = vmatprep.subr.mxu0 0.0
        %626 = vmatpush1.xpose.msra.mxu0 0.0
        %627 = vmatprep.subr.mxu0 0.0
        %628 = vmatpush1.xpose.msra.mxu0 0.0
        %629 = vmatprep.subr.mxu0 0.0
        %630 = vmatpush1.xpose.msra.mxu0 0.0
        %631 = vmatprep.subr.mxu0 0.0
        %632 = vmatpush1.xpose.msra.mxu0 0.0
        %633 = vmatprep.subr.mxu0 0.0
        %634 = vmatpush1.xpose.msra.mxu0 0.0
        %635 = vmatprep.subr.mxu0 0.0
        %636 = vmatpush1.xpose.msra.mxu0 0.0
        %637 = vmatprep.subr.mxu0 0.0
        %638 = vmatpush1.xpose.msra.mxu0 0.0
        %639 = vmatprep.subr.mxu0 0.0
        %640 = vmatpush1.xpose.msra.mxu0 0.0
        %641 = vmatprep.subr.mxu0 0.0
        %642 = vmatpush1.xpose.msra.mxu0 0.0
        %643 = vmatprep.subr.mxu0 0.0
        %644 = vmatpush1.xpose.msra.mxu0 0.0
        %645 = vmatprep.subr.mxu0 0.0
        %646 = vmatpush1.xpose.msra.mxu0 0.0
        %647 = vmatprep.subr.mxu0 0.0
        %648 = vmatpush1.xpose.msra.mxu0 0.0
        %649 = vmatprep.subr.mxu0 0.0
        %650 = vmatpush1.xpose.msra.mxu0 0.0
        %651 = vmatprep.subr.mxu0 0.0
        %652 = vmatpush1.xpose.msra.mxu0 0.0
        %653 = vmatprep.subr.mxu0 0.0
        %654 = vmatpush1.xpose.msra.mxu0 0.0
        %655 = vmatprep.subr.mxu0 0.0
        %656 = vmatpush1.xpose.msra.mxu0 0.0
        %657 = vmatprep.subr.mxu0 0.0
        %658 = vmatpush1.xpose.msra.mxu0 0.0
        %659 = vmatprep.subr.mxu0 0.0
        %660 = vmatpush1.xpose.msra.mxu0 0.0
        %661 = vmatprep.subr.mxu0 0.0
        %662 = vmatpush1.xpose.msra.mxu0 0.0
        %663 = vmatprep.subr.mxu0 0.0
        %664 = vmatpush1.xpose.msra.mxu0 0.0
        %665 = vmatprep.subr.mxu0 0.0
        %666 = vmatpush1.xpose.msra.mxu0 0.0
        %667 = vmatprep.subr.mxu0 0.0
        %668 = vmatpush1.xpose.msra.mxu0 0.0
        %669 = vmatprep.mubr.f32.mxu0 0.0
        %670 = vmatmul.mubr.f32.gmra.mrb[0].mxu0 %v601
        %v671 = vpop.f32.mrb[0].mxu0
        %v672 = vadd.f32 0.0, %v671
        %v673 = vpop.f32.mrb[0].mxu0
        %674 = vdwg.mxu0
        %675 = vrot.lane.b32.xlu0 %v441, 96
        %v676 = vpop.permute.xlu0 %675
        %v677 = vsel %vm448, %v420, 0
        %v679 = vsel %vm448, %v676, 0
        %681 = vmatprep.subr.mxu0 0.0
        %682 = vmatpush1.xpose.msra.mxu0 %v679
        %683 = vmatprep.subr.mxu0 0.0
        %684 = vmatpush1.xpose.msra.mxu0 0.0
        %685 = vmatprep.subr.mxu0 0.0
        %686 = vmatpush1.xpose.msra.mxu0 0.0
        %687 = vmatprep.subr.mxu0 0.0
        %688 = vmatpush1.xpose.msra.mxu0 0.0
        %689 = vmatprep.subr.mxu0 0.0
        %690 = vmatpush1.xpose.msra.mxu0 0.0
        %691 = vmatprep.subr.mxu0 0.0
        %692 = vmatpush1.xpose.msra.mxu0 0.0
        %693 = vmatprep.subr.mxu0 0.0
        %694 = vmatpush1.xpose.msra.mxu0 0.0
        %695 = vmatprep.subr.mxu0 0.0
        %696 = vmatpush1.xpose.msra.mxu0 0.0
        %697 = vmatprep.subr.mxu0 0.0
        %698 = vmatpush1.xpose.msra.mxu0 0.0
        %699 = vmatprep.subr.mxu0 0.0
        %700 = vmatpush1.xpose.msra.mxu0 0.0
        %701 = vmatprep.subr.mxu0 0.0
        %702 = vmatpush1.xpose.msra.mxu0 0.0
        %703 = vmatprep.subr.mxu0 0.0
        %704 = vmatpush1.xpose.msra.mxu0 0.0
        %705 = vmatprep.subr.mxu0 0.0
        %706 = vmatpush1.xpose.msra.mxu0 0.0
        %707 = vmatprep.subr.mxu0 0.0
        %708 = vmatpush1.xpose.msra.mxu0 0.0
        %709 = vmatprep.subr.mxu0 0.0
        %710 = vmatpush1.xpose.msra.mxu0 0.0
        %711 = vmatprep.subr.mxu0 0.0
        %712 = vmatpush1.xpose.msra.mxu0 0.0
        %713 = vmatprep.subr.mxu0 0.0
        %714 = vmatpush1.xpose.msra.mxu0 0.0
        %715 = vmatprep.subr.mxu0 0.0
        %716 = vmatpush1.xpose.msra.mxu0 0.0
        %717 = vmatprep.subr.mxu0 0.0
        %718 = vmatpush1.xpose.msra.mxu0 0.0
        %719 = vmatprep.subr.mxu0 0.0
        %720 = vmatpush1.xpose.msra.mxu0 0.0
        %721 = vmatprep.subr.mxu0 0.0
        %722 = vmatpush1.xpose.msra.mxu0 0.0
        %723 = vmatprep.subr.mxu0 0.0
        %724 = vmatpush1.xpose.msra.mxu0 0.0
        %725 = vmatprep.subr.mxu0 0.0
        %726 = vmatpush1.xpose.msra.mxu0 0.0
        %727 = vmatprep.subr.mxu0 0.0
        %728 = vmatpush1.xpose.msra.mxu0 0.0
        %729 = vmatprep.subr.mxu0 0.0
        %730 = vmatpush1.xpose.msra.mxu0 0.0
        %731 = vmatprep.subr.mxu0 0.0
        %732 = vmatpush1.xpose.msra.mxu0 0.0
        %733 = vmatprep.subr.mxu0 0.0
        %734 = vmatpush1.xpose.msra.mxu0 0.0
        %735 = vmatprep.subr.mxu0 0.0
        %736 = vmatpush1.xpose.msra.mxu0 0.0
        %737 = vmatprep.subr.mxu0 0.0
        %738 = vmatpush1.xpose.msra.mxu0 0.0
        %739 = vmatprep.subr.mxu0 0.0
        %740 = vmatpush1.xpose.msra.mxu0 0.0
        %741 = vmatprep.subr.mxu0 0.0
        %742 = vmatpush1.xpose.msra.mxu0 0.0
        %743 = vmatprep.subr.mxu0 0.0
        %744 = vmatpush1.xpose.msra.mxu0 0.0
        %745 = vmatprep.mubr.f32.mxu0 0.0
        %746 = vmatmul.mubr.f32.gmra.mrb[0].mxu0 %v677
        %v747 = vpop.f32.mrb[0].mxu0
        %v748 = vadd.f32 0.0, %v747
        %v749 = vpop.f32.mrb[0].mxu0
        %750 = vdwg.mxu0
        %751 = vst.msk [vmem:[#allocation2] sm:$0xff] %vm448, %v520
        %752 = vst.msk [vmem:[#allocation2 + $0x8] sm:$0xff] %vm448, %v596
        %753 = vst.msk [vmem:[#allocation2 + $0x10] sm:$0xff] %vm448, %v672
        %754 = vst.msk [vmem:[#allocation2 + $0x18] sm:$0xff] %vm448, %v748
        %755 = vrot.lane.b32.xlu0 %v388, 64
        %v756 = vpop.permute.xlu0 %755
        %757 = vrot.lane.b32.xlu0 %v429, 64
        %v758 = vpop.permute.xlu0 %757
        %759 = vrot.lane.b32.xlu0 %v435, 64
        %v760 = vpop.permute.xlu0 %759
        %761 = vrot.lane.b32.xlu0 %v441, 64
        %v762 = vpop.permute.xlu0 %761
        %767 = vst.msk [vmem:[#allocation3] sm:$0xff] %vm448, %v756
        %768 = vst.msk [vmem:[#allocation3 + $0x8] sm:$0xff] %vm448, %v758
        %769 = vst.msk [vmem:[#allocation3 + $0x10] sm:$0xff] %vm448, %v760
        %770 = vst.msk [vmem:[#allocation3 + $0x18] sm:$0xff] %vm448, %v762
        %771 = vrot.lane.b32.xlu0 %v393, 96
        %v772 = vpop.permute.xlu0 %771
        %v773 = vsel %vm448, %v402, 0
        %v775 = vsel %vm448, %v772, 0
        %777 = vmatprep.subr.mxu0 0.0
        %778 = vmatpush1.xpose.msra.mxu0 %v775
        %779 = vmatprep.subr.mxu0 0.0
        %780 = vmatpush1.xpose.msra.mxu0 0.0
        %781 = vmatprep.subr.mxu0 0.0
        %782 = vmatpush1.xpose.msra.mxu0 0.0
        %783 = vmatprep.subr.mxu0 0.0
        %784 = vmatpush1.xpose.msra.mxu0 0.0
        %785 = vmatprep.subr.mxu0 0.0
        %786 = vmatpush1.xpose.msra.mxu0 0.0
        %787 = vmatprep.subr.mxu0 0.0
        %788 = vmatpush1.xpose.msra.mxu0 0.0
        %789 = vmatprep.subr.mxu0 0.0
        %790 = vmatpush1.xpose.msra.mxu0 0.0
        %791 = vmatprep.subr.mxu0 0.0
        %792 = vmatpush1.xpose.msra.mxu0 0.0
        %793 = vmatprep.subr.mxu0 0.0
        %794 = vmatpush1.xpose.msra.mxu0 0.0
        %795 = vmatprep.subr.mxu0 0.0
        %796 = vmatpush1.xpose.msra.mxu0 0.0
        %797 = vmatprep.subr.mxu0 0.0
        %798 = vmatpush1.xpose.msra.mxu0 0.0
        %799 = vmatprep.subr.mxu0 0.0
        %800 = vmatpush1.xpose.msra.mxu0 0.0
        %801 = vmatprep.subr.mxu0 0.0
        %802 = vmatpush1.xpose.msra.mxu0 0.0
        %803 = vmatprep.subr.mxu0 0.0
        %804 = vmatpush1.xpose.msra.mxu0 0.0
        %805 = vmatprep.subr.mxu0 0.0
        %806 = vmatpush1.xpose.msra.mxu0 0.0
        %807 = vmatprep.subr.mxu0 0.0
        %808 = vmatpush1.xpose.msra.mxu0 0.0
        %809 = vmatprep.subr.mxu0 0.0
        %810 = vmatpush1.xpose.msra.mxu0 0.0
        %811 = vmatprep.subr.mxu0 0.0
        %812 = vmatpush1.xpose.msra.mxu0 0.0
        %813 = vmatprep.subr.mxu0 0.0
        %814 = vmatpush1.xpose.msra.mxu0 0.0
        %815 = vmatprep.subr.mxu0 0.0
        %816 = vmatpush1.xpose.msra.mxu0 0.0
        %817 = vmatprep.subr.mxu0 0.0
        %818 = vmatpush1.xpose.msra.mxu0 0.0
        %819 = vmatprep.subr.mxu0 0.0
        %820 = vmatpush1.xpose.msra.mxu0 0.0
        %821 = vmatprep.subr.mxu0 0.0
        %822 = vmatpush1.xpose.msra.mxu0 0.0
        %823 = vmatprep.subr.mxu0 0.0
        %824 = vmatpush1.xpose.msra.mxu0 0.0
        %825 = vmatprep.subr.mxu0 0.0
        %826 = vmatpush1.xpose.msra.mxu0 0.0
        %827 = vmatprep.subr.mxu0 0.0
        %828 = vmatpush1.xpose.msra.mxu0 0.0
        %829 = vmatprep.subr.mxu0 0.0
        %830 = vmatpush1.xpose.msra.mxu0 0.0
        %831 = vmatprep.subr.mxu0 0.0
        %832 = vmatpush1.xpose.msra.mxu0 0.0
        %833 = vmatprep.subr.mxu0 0.0
        %834 = vmatpush1.xpose.msra.mxu0 0.0
        %835 = vmatprep.subr.mxu0 0.0
        %836 = vmatpush1.xpose.msra.mxu0 0.0
        %837 = vmatprep.subr.mxu0 0.0
        %838 = vmatpush1.xpose.msra.mxu0 0.0
        %839 = vmatprep.subr.mxu0 0.0
        %840 = vmatpush1.xpose.msra.mxu0 0.0
        %841 = vmatprep.mubr.f32.mxu0 0.0
        %842 = vmatmul.mubr.f32.gmra.mrb[0].mxu0 %v773
        %v843 = vpop.f32.mrb[0].mxu0
        %v844 = vadd.f32 0.0, %v843
        %v845 = vpop.f32.mrb[0].mxu0
        %846 = vdwg.mxu0
        %847 = vrot.lane.b32.xlu0 %v431, 96
        %v848 = vpop.permute.xlu0 %847
        %v849 = vsel %vm448, %v410, 0
        %v851 = vsel %vm448, %v848, 0
        %853 = vmatprep.subr.mxu0 0.0
        %854 = vmatpush1.xpose.msra.mxu0 %v851
        %855 = vmatprep.subr.mxu0 0.0
        %856 = vmatpush1.xpose.msra.mxu0 0.0
        %857 = vmatprep.subr.mxu0 0.0
        %858 = vmatpush1.xpose.msra.mxu0 0.0
        %859 = vmatprep.subr.mxu0 0.0
        %860 = vmatpush1.xpose.msra.mxu0 0.0
        %861 = vmatprep.subr.mxu0 0.0
        %862 = vmatpush1.xpose.msra.mxu0 0.0
        %863 = vmatprep.subr.mxu0 0.0
        %864 = vmatpush1.xpose.msra.mxu0 0.0
        %865 = vmatprep.subr.mxu0 0.0
        %866 = vmatpush1.xpose.msra.mxu0 0.0
        %867 = vmatprep.subr.mxu0 0.0
        %868 = vmatpush1.xpose.msra.mxu0 0.0
        %869 = vmatprep.subr.mxu0 0.0
        %870 = vmatpush1.xpose.msra.mxu0 0.0
        %871 = vmatprep.subr.mxu0 0.0
        %872 = vmatpush1.xpose.msra.mxu0 0.0
        %873 = vmatprep.subr.mxu0 0.0
        %874 = vmatpush1.xpose.msra.mxu0 0.0
        %875 = vmatprep.subr.mxu0 0.0
        %876 = vmatpush1.xpose.msra.mxu0 0.0
        %877 = vmatprep.subr.mxu0 0.0
        %878 = vmatpush1.xpose.msra.mxu0 0.0
        %879 = vmatprep.subr.mxu0 0.0
        %880 = vmatpush1.xpose.msra.mxu0 0.0
        %881 = vmatprep.subr.mxu0 0.0
        %882 = vmatpush1.xpose.msra.mxu0 0.0
        %883 = vmatprep.subr.mxu0 0.0
        %884 = vmatpush1.xpose.msra.mxu0 0.0
        %885 = vmatprep.subr.mxu0 0.0
        %886 = vmatpush1.xpose.msra.mxu0 0.0
        %887 = vmatprep.subr.mxu0 0.0
        %888 = vmatpush1.xpose.msra.mxu0 0.0
        %889 = vmatprep.subr.mxu0 0.0
        %890 = vmatpush1.xpose.msra.mxu0 0.0
        %891 = vmatprep.subr.mxu0 0.0
        %892 = vmatpush1.xpose.msra.mxu0 0.0
        %893 = vmatprep.subr.mxu0 0.0
        %894 = vmatpush1.xpose.msra.mxu0 0.0
        %895 = vmatprep.subr.mxu0 0.0
        %896 = vmatpush1.xpose.msra.mxu0 0.0
        %897 = vmatprep.subr.mxu0 0.0
        %898 = vmatpush1.xpose.msra.mxu0 0.0
        %899 = vmatprep.subr.mxu0 0.0
        %900 = vmatpush1.xpose.msra.mxu0 0.0
        %901 = vmatprep.subr.mxu0 0.0
        %902 = vmatpush1.xpose.msra.mxu0 0.0
        %903 = vmatprep.subr.mxu0 0.0
        %904 = vmatpush1.xpose.msra.mxu0 0.0
        %905 = vmatprep.subr.mxu0 0.0
        %906 = vmatpush1.xpose.msra.mxu0 0.0
        %907 = vmatprep.subr.mxu0 0.0
        %908 = vmatpush1.xpose.msra.mxu0 0.0
        %909 = vmatprep.subr.mxu0 0.0
        %910 = vmatpush1.xpose.msra.mxu0 0.0
        %911 = vmatprep.subr.mxu0 0.0
        %912 = vmatpush1.xpose.msra.mxu0 0.0
        %913 = vmatprep.subr.mxu0 0.0
        %914 = vmatpush1.xpose.msra.mxu0 0.0
        %915 = vmatprep.subr.mxu0 0.0
        %916 = vmatpush1.xpose.msra.mxu0 0.0
        %917 = vmatprep.mubr.f32.mxu0 0.0
        %918 = vmatmul.mubr.f32.gmra.mrb[0].mxu0 %v849
        %v919 = vpop.f32.mrb[0].mxu0
        %v920 = vadd.f32 0.0, %v919
        %v921 = vpop.f32.mrb[0].mxu0
        %922 = vdwg.mxu0
        %923 = vrot.lane.b32.xlu0 %v437, 96
        %v924 = vpop.permute.xlu0 %923
        %v925 = vsel %vm448, %v416, 0
        %v927 = vsel %vm448, %v924, 0
        %929 = vmatprep.subr.mxu0 0.0
        %930 = vmatpush1.xpose.msra.mxu0 %v927
        %931 = vmatprep.subr.mxu0 0.0
        %932 = vmatpush1.xpose.msra.mxu0 0.0
        %933 = vmatprep.subr.mxu0 0.0
        %934 = vmatpush1.xpose.msra.mxu0 0.0
        %935 = vmatprep.subr.mxu0 0.0
        %936 = vmatpush1.xpose.msra.mxu0 0.0
        %937 = vmatprep.subr.mxu0 0.0
        %938 = vmatpush1.xpose.msra.mxu0 0.0
        %939 = vmatprep.subr.mxu0 0.0
        %940 = vmatpush1.xpose.msra.mxu0 0.0
        %941 = vmatprep.subr.mxu0 0.0
        %942 = vmatpush1.xpose.msra.mxu0 0.0
        %943 = vmatprep.subr.mxu0 0.0
        %944 = vmatpush1.xpose.msra.mxu0 0.0
        %945 = vmatprep.subr.mxu0 0.0
        %946 = vmatpush1.xpose.msra.mxu0 0.0
        %947 = vmatprep.subr.mxu0 0.0
        %948 = vmatpush1.xpose.msra.mxu0 0.0
        %949 = vmatprep.subr.mxu0 0.0
        %950 = vmatpush1.xpose.msra.mxu0 0.0
        %951 = vmatprep.subr.mxu0 0.0
        %952 = vmatpush1.xpose.msra.mxu0 0.0
        %953 = vmatprep.subr.mxu0 0.0
        %954 = vmatpush1.xpose.msra.mxu0 0.0
        %955 = vmatprep.subr.mxu0 0.0
        %956 = vmatpush1.xpose.msra.mxu0 0.0
        %957 = vmatprep.subr.mxu0 0.0
        %958 = vmatpush1.xpose.msra.mxu0 0.0
        %959 = vmatprep.subr.mxu0 0.0
        %960 = vmatpush1.xpose.msra.mxu0 0.0
        %961 = vmatprep.subr.mxu0 0.0
        %962 = vmatpush1.xpose.msra.mxu0 0.0
        %963 = vmatprep.subr.mxu0 0.0
        %964 = vmatpush1.xpose.msra.mxu0 0.0
        %965 = vmatprep.subr.mxu0 0.0
        %966 = vmatpush1.xpose.msra.mxu0 0.0
        %967 = vmatprep.subr.mxu0 0.0
        %968 = vmatpush1.xpose.msra.mxu0 0.0
        %969 = vmatprep.subr.mxu0 0.0
        %970 = vmatpush1.xpose.msra.mxu0 0.0
        %971 = vmatprep.subr.mxu0 0.0
        %972 = vmatpush1.xpose.msra.mxu0 0.0
        %973 = vmatprep.subr.mxu0 0.0
        %974 = vmatpush1.xpose.msra.mxu0 0.0
        %975 = vmatprep.subr.mxu0 0.0
        %976 = vmatpush1.xpose.msra.mxu0 0.0
        %977 = vmatprep.subr.mxu0 0.0
        %978 = vmatpush1.xpose.msra.mxu0 0.0
        %979 = vmatprep.subr.mxu0 0.0
        %980 = vmatpush1.xpose.msra.mxu0 0.0
        %981 = vmatprep.subr.mxu0 0.0
        %982 = vmatpush1.xpose.msra.mxu0 0.0
        %983 = vmatprep.subr.mxu0 0.0
        %984 = vmatpush1.xpose.msra.mxu0 0.0
        %985 = vmatprep.subr.mxu0 0.0
        %986 = vmatpush1.xpose.msra.mxu0 0.0
        %987 = vmatprep.subr.mxu0 0.0
        %988 = vmatpush1.xpose.msra.mxu0 0.0
        %989 = vmatprep.subr.mxu0 0.0
        %990 = vmatpush1.xpose.msra.mxu0 0.0
        %991 = vmatprep.subr.mxu0 0.0
        %992 = vmatpush1.xpose.msra.mxu0 0.0
        %993 = vmatprep.mubr.f32.mxu0 0.0
        %994 = vmatmul.mubr.f32.gmra.mrb[0].mxu0 %v925
        %v995 = vpop.f32.mrb[0].mxu0
        %v996 = vadd.f32 0.0, %v995
        %v997 = vpop.f32.mrb[0].mxu0
        %998 = vdwg.mxu0
        %999 = vrot.lane.b32.xlu0 %v443, 96
        %v1000 = vpop.permute.xlu0 %999
        %v1001 = vsel %vm448, %v422, 0
        %v1003 = vsel %vm448, %v1000, 0
        %1005 = vmatprep.subr.mxu0 0.0
        %1006 = vmatpush1.xpose.msra.mxu0 %v1003
        %1007 = vmatprep.subr.mxu0 0.0
        %1008 = vmatpush1.xpose.msra.mxu0 0.0
        %1009 = vmatprep.subr.mxu0 0.0
        %1010 = vmatpush1.xpose.msra.mxu0 0.0
        %1011 = vmatprep.subr.mxu0 0.0
        %1012 = vmatpush1.xpose.msra.mxu0 0.0
        %1013 = vmatprep.subr.mxu0 0.0
        %1014 = vmatpush1.xpose.msra.mxu0 0.0
        %1015 = vmatprep.subr.mxu0 0.0
        %1016 = vmatpush1.xpose.msra.mxu0 0.0
        %1017 = vmatprep.subr.mxu0 0.0
        %1018 = vmatpush1.xpose.msra.mxu0 0.0
        %1019 = vmatprep.subr.mxu0 0.0
        %1020 = vmatpush1.xpose.msra.mxu0 0.0
        %1021 = vmatprep.subr.mxu0 0.0
        %1022 = vmatpush1.xpose.msra.mxu0 0.0
        %1023 = vmatprep.subr.mxu0 0.0
        %1024 = vmatpush1.xpose.msra.mxu0 0.0
        %1025 = vmatprep.subr.mxu0 0.0
        %1026 = vmatpush1.xpose.msra.mxu0 0.0
        %1027 = vmatprep.subr.mxu0 0.0
        %1028 = vmatpush1.xpose.msra.mxu0 0.0
        %1029 = vmatprep.subr.mxu0 0.0
        %1030 = vmatpush1.xpose.msra.mxu0 0.0
        %1031 = vmatprep.subr.mxu0 0.0
        %1032 = vmatpush1.xpose.msra.mxu0 0.0
        %1033 = vmatprep.subr.mxu0 0.0
        %1034 = vmatpush1.xpose.msra.mxu0 0.0
        %1035 = vmatprep.subr.mxu0 0.0
        %1036 = vmatpush1.xpose.msra.mxu0 0.0
        %1037 = vmatprep.subr.mxu0 0.0
        %1038 = vmatpush1.xpose.msra.mxu0 0.0
        %1039 = vmatprep.subr.mxu0 0.0
        %1040 = vmatpush1.xpose.msra.mxu0 0.0
        %1041 = vmatprep.subr.mxu0 0.0
        %1042 = vmatpush1.xpose.msra.mxu0 0.0
        %1043 = vmatprep.subr.mxu0 0.0
        %1044 = vmatpush1.xpose.msra.mxu0 0.0
        %1045 = vmatprep.subr.mxu0 0.0
        %1046 = vmatpush1.xpose.msra.mxu0 0.0
        %1047 = vmatprep.subr.mxu0 0.0
        %1048 = vmatpush1.xpose.msra.mxu0 0.0
        %1049 = vmatprep.subr.mxu0 0.0
        %1050 = vmatpush1.xpose.msra.mxu0 0.0
        %1051 = vmatprep.subr.mxu0 0.0
        %1052 = vmatpush1.xpose.msra.mxu0 0.0
        %1053 = vmatprep.subr.mxu0 0.0
        %1054 = vmatpush1.xpose.msra.mxu0 0.0
        %1055 = vmatprep.subr.mxu0 0.0
        %1056 = vmatpush1.xpose.msra.mxu0 0.0
        %1057 = vmatprep.subr.mxu0 0.0
        %1058 = vmatpush1.xpose.msra.mxu0 0.0
        %1059 = vmatprep.subr.mxu0 0.0
        %1060 = vmatpush1.xpose.msra.mxu0 0.0
        %1061 = vmatprep.subr.mxu0 0.0
        %1062 = vmatpush1.xpose.msra.mxu0 0.0
        %1063 = vmatprep.subr.mxu0 0.0
        %1064 = vmatpush1.xpose.msra.mxu0 0.0
        %1065 = vmatprep.subr.mxu0 0.0
        %1066 = vmatpush1.xpose.msra.mxu0 0.0
        %1067 = vmatprep.subr.mxu0 0.0
        %1068 = vmatpush1.xpose.msra.mxu0 0.0
        %1069 = vmatprep.mubr.f32.mxu0 0.0
        %1070 = vmatmul.mubr.f32.gmra.mrb[0].mxu0 %v1001
        %v1071 = vpop.f32.mrb[0].mxu0
        %v1072 = vadd.f32 0.0, %v1071
        %v1073 = vpop.f32.mrb[0].mxu0
        %1074 = vdwg.mxu0
        %s1075 = scalar_lea.vmem [#allocation2], 32
        %1076 = vst.msk [vmem:[%s1075] sm:$0xff] %vm448, %v844
        %1077 = vst.msk [vmem:[%s1075 + $0x8] sm:$0xff] %vm448, %v920
        %1078 = vst.msk [vmem:[%s1075 + $0x10] sm:$0xff] %vm448, %v996
        %1079 = vst.msk [vmem:[%s1075 + $0x18] sm:$0xff] %vm448, %v1072
        %1080 = vrot.lane.b32.xlu0 %v393, 64
        %v1081 = vpop.permute.xlu0 %1080
        %1082 = vrot.lane.b32.xlu0 %v431, 64
        %v1083 = vpop.permute.xlu0 %1082
        %1084 = vrot.lane.b32.xlu0 %v437, 64
        %v1085 = vpop.permute.xlu0 %1084
        %1086 = vrot.lane.b32.xlu0 %v443, 64
        %v1087 = vpop.permute.xlu0 %1086
        %s1092 = scalar_lea.vmem [#allocation3], 32
        %1093 = vst.msk [vmem:[%s1092] sm:$0xff] %vm448, %v1081
        %1094 = vst.msk [vmem:[%s1092 + $0x8] sm:$0xff] %vm448, %v1083
        %1095 = vst.msk [vmem:[%s1092 + $0x10] sm:$0xff] %vm448, %v1085
        %1096 = vst.msk [vmem:[%s1092 + $0x18] sm:$0xff] %vm448, %v1087
        %1097 = vrot.lane.b32.xlu0 %v398, 96
        %v1098 = vpop.permute.xlu0 %1097
        %v1099 = vsel %vm448, %v403, 0
        %v1101 = vsel %vm448, %v1098, 0
        %1103 = vmatprep.subr.mxu0 0.0
        %1104 = vmatpush1.xpose.msra.mxu0 %v1101
        %1105 = vmatprep.subr.mxu0 0.0
        %1106 = vmatpush1.xpose.msra.mxu0 0.0
        %1107 = vmatprep.subr.mxu0 0.0
        %1108 = vmatpush1.xpose.msra.mxu0 0.0
        %1109 = vmatprep.subr.mxu0 0.0
        %1110 = vmatpush1.xpose.msra.mxu0 0.0
        %1111 = vmatprep.subr.mxu0 0.0
        %1112 = vmatpush1.xpose.msra.mxu0 0.0
        %1113 = vmatprep.subr.mxu0 0.0
        %1114 = vmatpush1.xpose.msra.mxu0 0.0
        %1115 = vmatprep.subr.mxu0 0.0
        %1116 = vmatpush1.xpose.msra.mxu0 0.0
        %1117 = vmatprep.subr.mxu0 0.0
        %1118 = vmatpush1.xpose.msra.mxu0 0.0
        %1119 = vmatprep.subr.mxu0 0.0
        %1120 = vmatpush1.xpose.msra.mxu0 0.0
        %1121 = vmatprep.subr.mxu0 0.0
        %1122 = vmatpush1.xpose.msra.mxu0 0.0
        %1123 = vmatprep.subr.mxu0 0.0
        %1124 = vmatpush1.xpose.msra.mxu0 0.0
        %1125 = vmatprep.subr.mxu0 0.0
        %1126 = vmatpush1.xpose.msra.mxu0 0.0
        %1127 = vmatprep.subr.mxu0 0.0
        %1128 = vmatpush1.xpose.msra.mxu0 0.0
        %1129 = vmatprep.subr.mxu0 0.0
        %1130 = vmatpush1.xpose.msra.mxu0 0.0
        %1131 = vmatprep.subr.mxu0 0.0
        %1132 = vmatpush1.xpose.msra.mxu0 0.0
        %1133 = vmatprep.subr.mxu0 0.0
        %1134 = vmatpush1.xpose.msra.mxu0 0.0
        %1135 = vmatprep.subr.mxu0 0.0
        %1136 = vmatpush1.xpose.msra.mxu0 0.0
        %1137 = vmatprep.subr.mxu0 0.0
        %1138 = vmatpush1.xpose.msra.mxu0 0.0
        %1139 = vmatprep.subr.mxu0 0.0
        %1140 = vmatpush1.xpose.msra.mxu0 0.0
        %1141 = vmatprep.subr.mxu0 0.0
        %1142 = vmatpush1.xpose.msra.mxu0 0.0
        %1143 = vmatprep.subr.mxu0 0.0
        %1144 = vmatpush1.xpose.msra.mxu0 0.0
        %1145 = vmatprep.subr.mxu0 0.0
        %1146 = vmatpush1.xpose.msra.mxu0 0.0
        %1147 = vmatprep.subr.mxu0 0.0
        %1148 = vmatpush1.xpose.msra.mxu0 0.0
        %1149 = vmatprep.subr.mxu0 0.0
        %1150 = vmatpush1.xpose.msra.mxu0 0.0
        %1151 = vmatprep.subr.mxu0 0.0
        %1152 = vmatpush1.xpose.msra.mxu0 0.0
        %1153 = vmatprep.subr.mxu0 0.0
        %1154 = vmatpush1.xpose.msra.mxu0 0.0
        %1155 = vmatprep.subr.mxu0 0.0
        %1156 = vmatpush1.xpose.msra.mxu0 0.0
        %1157 = vmatprep.subr.mxu0 0.0
        %1158 = vmatpush1.xpose.msra.mxu0 0.0
        %1159 = vmatprep.subr.mxu0 0.0
        %1160 = vmatpush1.xpose.msra.mxu0 0.0
        %1161 = vmatprep.subr.mxu0 0.0
        %1162 = vmatpush1.xpose.msra.mxu0 0.0
        %1163 = vmatprep.subr.mxu0 0.0
        %1164 = vmatpush1.xpose.msra.mxu0 0.0
        %1165 = vmatprep.subr.mxu0 0.0
        %1166 = vmatpush1.xpose.msra.mxu0 0.0
        %1167 = vmatprep.mubr.f32.mxu0 0.0
        %1168 = vmatmul.mubr.f32.gmra.mrb[0].mxu0 %v1099
        %v1169 = vpop.f32.mrb[0].mxu0
        %v1170 = vadd.f32 0.0, %v1169
        %v1171 = vpop.f32.mrb[0].mxu0
        %1172 = vdwg.mxu0
        %1173 = vrot.lane.b32.xlu0 %v433, 96
        %v1174 = vpop.permute.xlu0 %1173
        %v1175 = vsel %vm448, %v412, 0
        %v1177 = vsel %vm448, %v1174, 0
        %1179 = vmatprep.subr.mxu0 0.0
        %1180 = vmatpush1.xpose.msra.mxu0 %v1177
        %1181 = vmatprep.subr.mxu0 0.0
        %1182 = vmatpush1.xpose.msra.mxu0 0.0
        %1183 = vmatprep.subr.mxu0 0.0
        %1184 = vmatpush1.xpose.msra.mxu0 0.0
        %1185 = vmatprep.subr.mxu0 0.0
        %1186 = vmatpush1.xpose.msra.mxu0 0.0
        %1187 = vmatprep.subr.mxu0 0.0
        %1188 = vmatpush1.xpose.msra.mxu0 0.0
        %1189 = vmatprep.subr.mxu0 0.0
        %1190 = vmatpush1.xpose.msra.mxu0 0.0
        %1191 = vmatprep.subr.mxu0 0.0
        %1192 = vmatpush1.xpose.msra.mxu0 0.0
        %1193 = vmatprep.subr.mxu0 0.0
        %1194 = vmatpush1.xpose.msra.mxu0 0.0
        %1195 = vmatprep.subr.mxu0 0.0
        %1196 = vmatpush1.xpose.msra.mxu0 0.0
        %1197 = vmatprep.subr.mxu0 0.0
        %1198 = vmatpush1.xpose.msra.mxu0 0.0
        %1199 = vmatprep.subr.mxu0 0.0
        %1200 = vmatpush1.xpose.msra.mxu0 0.0
        %1201 = vmatprep.subr.mxu0 0.0
        %1202 = vmatpush1.xpose.msra.mxu0 0.0
        %1203 = vmatprep.subr.mxu0 0.0
        %1204 = vmatpush1.xpose.msra.mxu0 0.0
        %1205 = vmatprep.subr.mxu0 0.0
        %1206 = vmatpush1.xpose.msra.mxu0 0.0
        %1207 = vmatprep.subr.mxu0 0.0
        %1208 = vmatpush1.xpose.msra.mxu0 0.0
        %1209 = vmatprep.subr.mxu0 0.0
        %1210 = vmatpush1.xpose.msra.mxu0 0.0
        %1211 = vmatprep.subr.mxu0 0.0
        %1212 = vmatpush1.xpose.msra.mxu0 0.0
        %1213 = vmatprep.subr.mxu0 0.0
        %1214 = vmatpush1.xpose.msra.mxu0 0.0
        %1215 = vmatprep.subr.mxu0 0.0
        %1216 = vmatpush1.xpose.msra.mxu0 0.0
        %1217 = vmatprep.subr.mxu0 0.0
        %1218 = vmatpush1.xpose.msra.mxu0 0.0
        %1219 = vmatprep.subr.mxu0 0.0
        %1220 = vmatpush1.xpose.msra.mxu0 0.0
        %1221 = vmatprep.subr.mxu0 0.0
        %1222 = vmatpush1.xpose.msra.mxu0 0.0
        %1223 = vmatprep.subr.mxu0 0.0
        %1224 = vmatpush1.xpose.msra.mxu0 0.0
        %1225 = vmatprep.subr.mxu0 0.0
        %1226 = vmatpush1.xpose.msra.mxu0 0.0
        %1227 = vmatprep.subr.mxu0 0.0
        %1228 = vmatpush1.xpose.msra.mxu0 0.0
        %1229 = vmatprep.subr.mxu0 0.0
        %1230 = vmatpush1.xpose.msra.mxu0 0.0
        %1231 = vmatprep.subr.mxu0 0.0
        %1232 = vmatpush1.xpose.msra.mxu0 0.0
        %1233 = vmatprep.subr.mxu0 0.0
        %1234 = vmatpush1.xpose.msra.mxu0 0.0
        %1235 = vmatprep.subr.mxu0 0.0
        %1236 = vmatpush1.xpose.msra.mxu0 0.0
        %1237 = vmatprep.subr.mxu0 0.0
        %1238 = vmatpush1.xpose.msra.mxu0 0.0
        %1239 = vmatprep.subr.mxu0 0.0
        %1240 = vmatpush1.xpose.msra.mxu0 0.0
        %1241 = vmatprep.subr.mxu0 0.0
        %1242 = vmatpush1.xpose.msra.mxu0 0.0
        %1243 = vmatprep.mubr.f32.mxu0 0.0
        %1244 = vmatmul.mubr.f32.gmra.mrb[0].mxu0 %v1175
        %v1245 = vpop.f32.mrb[0].mxu0
        %v1246 = vadd.f32 0.0, %v1245
        %v1247 = vpop.f32.mrb[0].mxu0
        %1248 = vdwg.mxu0
        %1249 = vrot.lane.b32.xlu0 %v439, 96
        %v1250 = vpop.permute.xlu0 %1249
        %v1251 = vsel %vm448, %v418, 0
        %v1253 = vsel %vm448, %v1250, 0
        %1255 = vmatprep.subr.mxu0 0.0
        %1256 = vmatpush1.xpose.msra.mxu0 %v1253
        %1257 = vmatprep.subr.mxu0 0.0
        %1258 = vmatpush1.xpose.msra.mxu0 0.0
        %1259 = vmatprep.subr.mxu0 0.0
        %1260 = vmatpush1.xpose.msra.mxu0 0.0
        %1261 = vmatprep.subr.mxu0 0.0
        %1262 = vmatpush1.xpose.msra.mxu0 0.0
        %1263 = vmatprep.subr.mxu0 0.0
        %1264 = vmatpush1.xpose.msra.mxu0 0.0
        %1265 = vmatprep.subr.mxu0 0.0
        %1266 = vmatpush1.xpose.msra.mxu0 0.0
        %1267 = vmatprep.subr.mxu0 0.0
        %1268 = vmatpush1.xpose.msra.mxu0 0.0
        %1269 = vmatprep.subr.mxu0 0.0
        %1270 = vmatpush1.xpose.msra.mxu0 0.0
        %1271 = vmatprep.subr.mxu0 0.0
        %1272 = vmatpush1.xpose.msra.mxu0 0.0
        %1273 = vmatprep.subr.mxu0 0.0
        %1274 = vmatpush1.xpose.msra.mxu0 0.0
        %1275 = vmatprep.subr.mxu0 0.0
        %1276 = vmatpush1.xpose.msra.mxu0 0.0
        %1277 = vmatprep.subr.mxu0 0.0
        %1278 = vmatpush1.xpose.msra.mxu0 0.0
        %1279 = vmatprep.subr.mxu0 0.0
        %1280 = vmatpush1.xpose.msra.mxu0 0.0
        %1281 = vmatprep.subr.mxu0 0.0
        %1282 = vmatpush1.xpose.msra.mxu0 0.0
        %1283 = vmatprep.subr.mxu0 0.0
        %1284 = vmatpush1.xpose.msra.mxu0 0.0
        %1285 = vmatprep.subr.mxu0 0.0
        %1286 = vmatpush1.xpose.msra.mxu0 0.0
        %1287 = vmatprep.subr.mxu0 0.0
        %1288 = vmatpush1.xpose.msra.mxu0 0.0
        %1289 = vmatprep.subr.mxu0 0.0
        %1290 = vmatpush1.xpose.msra.mxu0 0.0
        %1291 = vmatprep.subr.mxu0 0.0
        %1292 = vmatpush1.xpose.msra.mxu0 0.0
        %1293 = vmatprep.subr.mxu0 0.0
        %1294 = vmatpush1.xpose.msra.mxu0 0.0
        %1295 = vmatprep.subr.mxu0 0.0
        %1296 = vmatpush1.xpose.msra.mxu0 0.0
        %1297 = vmatprep.subr.mxu0 0.0
        %1298 = vmatpush1.xpose.msra.mxu0 0.0
        %1299 = vmatprep.subr.mxu0 0.0
        %1300 = vmatpush1.xpose.msra.mxu0 0.0
        %1301 = vmatprep.subr.mxu0 0.0
        %1302 = vmatpush1.xpose.msra.mxu0 0.0
        %1303 = vmatprep.subr.mxu0 0.0
        %1304 = vmatpush1.xpose.msra.mxu0 0.0
        %1305 = vmatprep.subr.mxu0 0.0
        %1306 = vmatpush1.xpose.msra.mxu0 0.0
        %1307 = vmatprep.subr.mxu0 0.0
        %1308 = vmatpush1.xpose.msra.mxu0 0.0
        %1309 = vmatprep.subr.mxu0 0.0
        %1310 = vmatpush1.xpose.msra.mxu0 0.0
        %1311 = vmatprep.subr.mxu0 0.0
        %1312 = vmatpush1.xpose.msra.mxu0 0.0
        %1313 = vmatprep.subr.mxu0 0.0
        %1314 = vmatpush1.xpose.msra.mxu0 0.0
        %1315 = vmatprep.subr.mxu0 0.0
        %1316 = vmatpush1.xpose.msra.mxu0 0.0
        %1317 = vmatprep.subr.mxu0 0.0
        %1318 = vmatpush1.xpose.msra.mxu0 0.0
        %1319 = vmatprep.mubr.f32.mxu0 0.0
        %1320 = vmatmul.mubr.f32.gmra.mrb[0].mxu0 %v1251
        %v1321 = vpop.f32.mrb[0].mxu0
        %v1322 = vadd.f32 0.0, %v1321
        %v1323 = vpop.f32.mrb[0].mxu0
        %1324 = vdwg.mxu0
        %1325 = vrot.lane.b32.xlu0 %v445, 96
        %v1326 = vpop.permute.xlu0 %1325
        %v1327 = vsel %vm448, %v424, 0
        %v1329 = vsel %vm448, %v1326, 0
        %1331 = vmatprep.subr.mxu0 0.0
        %1332 = vmatpush1.xpose.msra.mxu0 %v1329
        %1333 = vmatprep.subr.mxu0 0.0
        %1334 = vmatpush1.xpose.msra.mxu0 0.0
        %1335 = vmatprep.subr.mxu0 0.0
        %1336 = vmatpush1.xpose.msra.mxu0 0.0
        %1337 = vmatprep.subr.mxu0 0.0
        %1338 = vmatpush1.xpose.msra.mxu0 0.0
        %1339 = vmatprep.subr.mxu0 0.0
        %1340 = vmatpush1.xpose.msra.mxu0 0.0
        %1341 = vmatprep.subr.mxu0 0.0
        %1342 = vmatpush1.xpose.msra.mxu0 0.0
        %1343 = vmatprep.subr.mxu0 0.0
        %1344 = vmatpush1.xpose.msra.mxu0 0.0
        %1345 = vmatprep.subr.mxu0 0.0
        %1346 = vmatpush1.xpose.msra.mxu0 0.0
        %1347 = vmatprep.subr.mxu0 0.0
        %1348 = vmatpush1.xpose.msra.mxu0 0.0
        %1349 = vmatprep.subr.mxu0 0.0
        %1350 = vmatpush1.xpose.msra.mxu0 0.0
        %1351 = vmatprep.subr.mxu0 0.0
        %1352 = vmatpush1.xpose.msra.mxu0 0.0
        %1353 = vmatprep.subr.mxu0 0.0
        %1354 = vmatpush1.xpose.msra.mxu0 0.0
        %1355 = vmatprep.subr.mxu0 0.0
        %1356 = vmatpush1.xpose.msra.mxu0 0.0
        %1357 = vmatprep.subr.mxu0 0.0
        %1358 = vmatpush1.xpose.msra.mxu0 0.0
        %1359 = vmatprep.subr.mxu0 0.0
        %1360 = vmatpush1.xpose.msra.mxu0 0.0
        %1361 = vmatprep.subr.mxu0 0.0
        %1362 = vmatpush1.xpose.msra.mxu0 0.0
        %1363 = vmatprep.subr.mxu0 0.0
        %1364 = vmatpush1.xpose.msra.mxu0 0.0
        %1365 = vmatprep.subr.mxu0 0.0
        %1366 = vmatpush1.xpose.msra.mxu0 0.0
        %1367 = vmatprep.subr.mxu0 0.0
        %1368 = vmatpush1.xpose.msra.mxu0 0.0
        %1369 = vmatprep.subr.mxu0 0.0
        %1370 = vmatpush1.xpose.msra.mxu0 0.0
        %1371 = vmatprep.subr.mxu0 0.0
        %1372 = vmatpush1.xpose.msra.mxu0 0.0
        %1373 = vmatprep.subr.mxu0 0.0
        %1374 = vmatpush1.xpose.msra.mxu0 0.0
        %1375 = vmatprep.subr.mxu0 0.0
        %1376 = vmatpush1.xpose.msra.mxu0 0.0
        %1377 = vmatprep.subr.mxu0 0.0
        %1378 = vmatpush1.xpose.msra.mxu0 0.0
        %1379 = vmatprep.subr.mxu0 0.0
        %1380 = vmatpush1.xpose.msra.mxu0 0.0
        %1381 = vmatprep.subr.mxu0 0.0
        %1382 = vmatpush1.xpose.msra.mxu0 0.0
        %1383 = vmatprep.subr.mxu0 0.0
        %1384 = vmatpush1.xpose.msra.mxu0 0.0
        %1385 = vmatprep.subr.mxu0 0.0
        %1386 = vmatpush1.xpose.msra.mxu0 0.0
        %1387 = vmatprep.subr.mxu0 0.0
        %1388 = vmatpush1.xpose.msra.mxu0 0.0
        %1389 = vmatprep.subr.mxu0 0.0
        %1390 = vmatpush1.xpose.msra.mxu0 0.0
        %1391 = vmatprep.subr.mxu0 0.0
        %1392 = vmatpush1.xpose.msra.mxu0 0.0
        %1393 = vmatprep.subr.mxu0 0.0
        %1394 = vmatpush1.xpose.msra.mxu0 0.0
        %1395 = vmatprep.mubr.f32.mxu0 0.0
        %1396 = vmatmul.mubr.f32.gmra.mrb[0].mxu0 %v1327
        %v1397 = vpop.f32.mrb[0].mxu0
        %v1398 = vadd.f32 0.0, %v1397
        %v1399 = vpop.f32.mrb[0].mxu0
        %1400 = vdwg.mxu0
        %s1401 = scalar_lea.vmem [#allocation2], 64
        %1402 = vst.msk [vmem:[%s1401] sm:$0xff] %vm448, %v1170
        %1403 = vst.msk [vmem:[%s1401 + $0x8] sm:$0xff] %vm448, %v1246
        %1404 = vst.msk [vmem:[%s1401 + $0x10] sm:$0xff] %vm448, %v1322
        %1405 = vst.msk [vmem:[%s1401 + $0x18] sm:$0xff] %vm448, %v1398
        %1406 = vrot.lane.b32.xlu0 %v398, 64
        %v1407 = vpop.permute.xlu0 %1406
        %1408 = vrot.lane.b32.xlu0 %v433, 64
        %v1409 = vpop.permute.xlu0 %1408
        %1410 = vrot.lane.b32.xlu0 %v439, 64
        %v1411 = vpop.permute.xlu0 %1410
        %1412 = vrot.lane.b32.xlu0 %v445, 64
        %v1413 = vpop.permute.xlu0 %1412
        %s1418 = scalar_lea.vmem [#allocation3], 64
        %1419 = vst.msk [vmem:[%s1418] sm:$0xff] %vm448, %v1407
        %1420 = vst.msk [vmem:[%s1418 + $0x8] sm:$0xff] %vm448, %v1409
        %1421 = vst.msk [vmem:[%s1418 + $0x10] sm:$0xff] %vm448, %v1411
        %1422 = vst.msk [vmem:[%s1418 + $0x18] sm:$0xff] %vm448, %v1413
        loop: start=0, step=1, limit=3
        $region61: #{tpu_custom_call.1} parent=39 // loop_pre_header
          _
        $region62: #{tpu_custom_call.1} parent=39 // loop_header
          %s1424 = sphi 0, %s1428
          %p1425 = scmp.ge.s32.totalorder %s1424, 3
        $region63: #{tpu_custom_call.1} parent=39 // loop_header_branch
          %1427 = sbr.rel (%p1425) target = $region67
        $region64: #{tpu_custom_call.1} parent=39 // loop_body
          %p1429 = scmp.eq.s32.totalorder %s1424, 2
          %s1430 = sadd.s32 %s1424, 1
          %s1431 = scalar_select %p1429, 0, %s1430
          %p1432 = scmp.eq.s32.totalorder %s1424, 0
          %s1433 = ssub.s32 %s1424, 1
          %s1434 = scalar_select %p1432, 2, %s1433
          %s1435 = smul.u32 %s1431, 32
          %s1436 = scalar_lea.vmem [#allocation2], %s1435
          %v1437 = vld [vmem:[%s1436] sm:$0xff]
          %v1438 = vld [vmem:[%s1436 + $0x8] sm:$0xff]
          %v1439 = vld [vmem:[%s1436 + $0x10] sm:$0xff]
          %v1440 = vld [vmem:[%s1436 + $0x18] sm:$0xff]
          %s1441 = smul.u32 %s1434, 32
          %s1442 = scalar_lea.vmem [#allocation2], %s1441
          %v1443 = vld [vmem:[%s1442] sm:$0xff]
          %v1444 = vld [vmem:[%s1442 + $0x8] sm:$0xff]
          %v1445 = vld [vmem:[%s1442 + $0x10] sm:$0xff]
          %v1446 = vld [vmem:[%s1442 + $0x18] sm:$0xff]
          %v1447 = vadd.f32 %v1437, %v1443
          %v1448 = vadd.f32 %v1438, %v1444
          %v1449 = vadd.f32 %v1439, %v1445
          %v1450 = vadd.f32 %v1440, %v1446
          %v1451 = vsel %vm448, %v1447, -inf
          %1452 = vmax.xlane.f32.xlu0 %v1451
          %v1453 = vpop.xlane.xlu0 %1452
          %v1454 = vsel %vm448, %v1448, -inf
          %1455 = vmax.xlane.f32.xlu0 %v1454
          %v1456 = vpop.xlane.xlu0 %1455
          %v1457 = vsel %vm448, %v1449, -inf
          %1458 = vmax.xlane.f32.xlu0 %v1457
          %v1459 = vpop.xlane.xlu0 %1458
          %v1460 = vsel %vm448, %v1450, -inf
          %1461 = vmax.xlane.f32.xlu0 %v1460
          %v1462 = vpop.xlane.xlu0 %1461
          %v1463 = vsub.f32 %v1447, %v1453
          %v1464 = vsub.f32 %v1448, %v1456
          %v1465 = vsub.f32 %v1449, %v1459
          %v1466 = vsub.f32 %v1450, %v1462
          %v1467 = vmul.f32 %v1463, 1.442695
          %v1468 = vpow.pop %v1467
          %v1469 = vmul.f32 %v1464, 1.442695
          %v1470 = vpow.pop %v1469
          %v1471 = vmul.f32 %v1465, 1.442695
          %v1472 = vpow.pop %v1471
          %v1473 = vmul.f32 %v1466, 1.442695
          %v1474 = vpow.pop %v1473
          %v1475 = vsel %vm448, %v1468, 0.0
          %1476 = vadd.xlane.f32.xlu0 %v1475
          %v1477 = vpop.xlane.xlu0 %1476
          %v1478 = vsel %vm448, %v1470, 0.0
          %1479 = vadd.xlane.f32.xlu0 %v1478
          %v1480 = vpop.xlane.xlu0 %1479
          %v1481 = vsel %vm448, %v1472, 0.0
          %1482 = vadd.xlane.f32.xlu0 %v1481
          %v1483 = vpop.xlane.xlu0 %1482
          %v1484 = vsel %vm448, %v1474, 0.0
          %1485 = vadd.xlane.f32.xlu0 %v1484
          %v1486 = vpop.xlane.xlu0 %1485
          %v1487 = vrcp.pop %v1477
          %v1488 = vrcp.pop %v1480
          %v1489 = vrcp.pop %v1483
          %v1490 = vrcp.pop %v1486
          %v1491 = vmul.f32 %v1468, %v1487
          %v1492 = vmul.f32 %v1470, %v1488
          %v1493 = vmul.f32 %v1472, %v1489
          %v1494 = vmul.f32 %v1474, %v1490
          %s1495 = smul.u32 %s1424, 32
          %s1496 = scalar_lea.vmem [#allocation3], %s1495
          %v1497 = vld [vmem:[%s1496] sm:$0xff]
          %v1498 = vld [vmem:[%s1496 + $0x8] sm:$0xff]
          %v1499 = vld [vmem:[%s1496 + $0x10] sm:$0xff]
          %v1500 = vld [vmem:[%s1496 + $0x18] sm:$0xff]
          %v1502 = vsel %vm448, %v1491, 0
          %1504 = vmatprep.subr.mxu0 0.0
          %1505 = vmatpush1.msra.mxu0 %v1497
          %1506 = vmatprep.subr.mxu0 0.0
          %1507 = vmatpush1.msra.mxu0 0.0
          %1508 = vmatprep.subr.mxu0 0.0
          %1509 = vmatpush1.msra.mxu0 0.0
          %1510 = vmatprep.subr.mxu0 0.0
          %1511 = vmatpush1.msra.mxu0 0.0
          %1512 = vmatprep.subr.mxu0 0.0
          %1513 = vmatpush1.msra.mxu0 0.0
          %1514 = vmatprep.subr.mxu0 0.0
          %1515 = vmatpush1.msra.mxu0 0.0
          %1516 = vmatprep.subr.mxu0 0.0
          %1517 = vmatpush1.msra.mxu0 0.0
          %1518 = vmatprep.subr.mxu0 0.0
          %1519 = vmatpush1.msra.mxu0 0.0
          %1520 = vmatprep.subr.mxu0 0.0
          %1521 = vmatpush1.msra.mxu0 0.0
          %1522 = vmatprep.subr.mxu0 0.0
          %1523 = vmatpush1.msra.mxu0 0.0
          %1524 = vmatprep.subr.mxu0 0.0
          %1525 = vmatpush1.msra.mxu0 0.0
          %1526 = vmatprep.subr.mxu0 0.0
          %1527 = vmatpush1.msra.mxu0 0.0
          %1528 = vmatprep.subr.mxu0 0.0
          %1529 = vmatpush1.msra.mxu0 0.0
          %1530 = vmatprep.subr.mxu0 0.0
          %1531 = vmatpush1.msra.mxu0 0.0
          %1532 = vmatprep.subr.mxu0 0.0
          %1533 = vmatpush1.msra.mxu0 0.0
          %1534 = vmatprep.subr.mxu0 0.0
          %1535 = vmatpush1.msra.mxu0 0.0
          %1536 = vmatprep.subr.mxu0 0.0
          %1537 = vmatpush1.msra.mxu0 0.0
          %1538 = vmatprep.subr.mxu0 0.0
          %1539 = vmatpush1.msra.mxu0 0.0
          %1540 = vmatprep.subr.mxu0 0.0
          %1541 = vmatpush1.msra.mxu0 0.0
          %1542 = vmatprep.subr.mxu0 0.0
          %1543 = vmatpush1.msra.mxu0 0.0
          %1544 = vmatprep.subr.mxu0 0.0
          %1545 = vmatpush1.msra.mxu0 0.0
          %1546 = vmatprep.subr.mxu0 0.0
          %1547 = vmatpush1.msra.mxu0 0.0
          %1548 = vmatprep.subr.mxu0 0.0
          %1549 = vmatpush1.msra.mxu0 0.0
          %1550 = vmatprep.subr.mxu0 0.0
          %1551 = vmatpush1.msra.mxu0 0.0
          %1552 = vmatprep.subr.mxu0 0.0
          %1553 = vmatpush1.msra.mxu0 0.0
          %1554 = vmatprep.subr.mxu0 0.0
          %1555 = vmatpush1.msra.mxu0 0.0
          %1556 = vmatprep.subr.mxu0 0.0
          %1557 = vmatpush1.msra.mxu0 0.0
          %1558 = vmatprep.subr.mxu0 0.0
          %1559 = vmatpush1.msra.mxu0 0.0
          %1560 = vmatprep.subr.mxu0 0.0
          %1561 = vmatpush1.msra.mxu0 0.0
          %1562 = vmatprep.subr.mxu0 0.0
          %1563 = vmatpush1.msra.mxu0 0.0
          %1564 = vmatprep.subr.mxu0 0.0
          %1565 = vmatpush1.msra.mxu0 0.0
          %1566 = vmatprep.subr.mxu0 0.0
          %1567 = vmatpush1.msra.mxu0 0.0
          %1568 = vmatprep.mubr.f32.mxu0 0.0
          %1569 = vmatmul.mubr.f32.gmra.mrb[0].mxu0 %v1502
          %v1570 = vpop.f32.mrb[0].mxu0
          %v1571 = vadd.f32 0.0, %v1570
          %v1572 = vpop.f32.mrb[0].mxu0
          %1573 = vdwg.mxu0
          %v1575 = vsel %vm448, %v1492, 0
          %1577 = vmatprep.subr.mxu0 0.0
          %1578 = vmatpush1.msra.mxu0 %v1498
          %1579 = vmatprep.subr.mxu0 0.0
          %1580 = vmatpush1.msra.mxu0 0.0
          %1581 = vmatprep.subr.mxu0 0.0
          %1582 = vmatpush1.msra.mxu0 0.0
          %1583 = vmatprep.subr.mxu0 0.0
          %1584 = vmatpush1.msra.mxu0 0.0
          %1585 = vmatprep.subr.mxu0 0.0
          %1586 = vmatpush1.msra.mxu0 0.0
          %1587 = vmatprep.subr.mxu0 0.0
          %1588 = vmatpush1.msra.mxu0 0.0
          %1589 = vmatprep.subr.mxu0 0.0
          %1590 = vmatpush1.msra.mxu0 0.0
          %1591 = vmatprep.subr.mxu0 0.0
          %1592 = vmatpush1.msra.mxu0 0.0
          %1593 = vmatprep.subr.mxu0 0.0
          %1594 = vmatpush1.msra.mxu0 0.0
          %1595 = vmatprep.subr.mxu0 0.0
          %1596 = vmatpush1.msra.mxu0 0.0
          %1597 = vmatprep.subr.mxu0 0.0
          %1598 = vmatpush1.msra.mxu0 0.0
          %1599 = vmatprep.subr.mxu0 0.0
          %1600 = vmatpush1.msra.mxu0 0.0
          %1601 = vmatprep.subr.mxu0 0.0
          %1602 = vmatpush1.msra.mxu0 0.0
          %1603 = vmatprep.subr.mxu0 0.0
          %1604 = vmatpush1.msra.mxu0 0.0
          %1605 = vmatprep.subr.mxu0 0.0
          %1606 = vmatpush1.msra.mxu0 0.0
          %1607 = vmatprep.subr.mxu0 0.0
          %1608 = vmatpush1.msra.mxu0 0.0
          %1609 = vmatprep.subr.mxu0 0.0
          %1610 = vmatpush1.msra.mxu0 0.0
          %1611 = vmatprep.subr.mxu0 0.0
          %1612 = vmatpush1.msra.mxu0 0.0
          %1613 = vmatprep.subr.mxu0 0.0
          %1614 = vmatpush1.msra.mxu0 0.0
          %1615 = vmatprep.subr.mxu0 0.0
          %1616 = vmatpush1.msra.mxu0 0.0
          %1617 = vmatprep.subr.mxu0 0.0
          %1618 = vmatpush1.msra.mxu0 0.0
          %1619 = vmatprep.subr.mxu0 0.0
          %1620 = vmatpush1.msra.mxu0 0.0
          %1621 = vmatprep.subr.mxu0 0.0
          %1622 = vmatpush1.msra.mxu0 0.0
          %1623 = vmatprep.subr.mxu0 0.0
          %1624 = vmatpush1.msra.mxu0 0.0
          %1625 = vmatprep.subr.mxu0 0.0
          %1626 = vmatpush1.msra.mxu0 0.0
          %1627 = vmatprep.subr.mxu0 0.0
          %1628 = vmatpush1.msra.mxu0 0.0
          %1629 = vmatprep.subr.mxu0 0.0
          %1630 = vmatpush1.msra.mxu0 0.0
          %1631 = vmatprep.subr.mxu0 0.0
          %1632 = vmatpush1.msra.mxu0 0.0
          %1633 = vmatprep.subr.mxu0 0.0
          %1634 = vmatpush1.msra.mxu0 0.0
          %1635 = vmatprep.subr.mxu0 0.0
          %1636 = vmatpush1.msra.mxu0 0.0
          %1637 = vmatprep.subr.mxu0 0.0
          %1638 = vmatpush1.msra.mxu0 0.0
          %1639 = vmatprep.subr.mxu0 0.0
          %1640 = vmatpush1.msra.mxu0 0.0
          %1641 = vmatprep.mubr.f32.mxu0 0.0
          %1642 = vmatmul.mubr.f32.gmra.mrb[0].mxu0 %v1575
          %v1643 = vpop.f32.mrb[0].mxu0
          %v1644 = vadd.f32 0.0, %v1643
          %v1645 = vpop.f32.mrb[0].mxu0
          %1646 = vdwg.mxu0
          %v1648 = vsel %vm448, %v1493, 0
          %1650 = vmatprep.subr.mxu0 0.0
          %1651 = vmatpush1.msra.mxu0 %v1499
          %1652 = vmatprep.subr.mxu0 0.0
          %1653 = vmatpush1.msra.mxu0 0.0
          %1654 = vmatprep.subr.mxu0 0.0
          %1655 = vmatpush1.msra.mxu0 0.0
          %1656 = vmatprep.subr.mxu0 0.0
          %1657 = vmatpush1.msra.mxu0 0.0
          %1658 = vmatprep.subr.mxu0 0.0
          %1659 = vmatpush1.msra.mxu0 0.0
          %1660 = vmatprep.subr.mxu0 0.0
          %1661 = vmatpush1.msra.mxu0 0.0
          %1662 = vmatprep.subr.mxu0 0.0
          %1663 = vmatpush1.msra.mxu0 0.0
          %1664 = vmatprep.subr.mxu0 0.0
          %1665 = vmatpush1.msra.mxu0 0.0
          %1666 = vmatprep.subr.mxu0 0.0
          %1667 = vmatpush1.msra.mxu0 0.0
          %1668 = vmatprep.subr.mxu0 0.0
          %1669 = vmatpush1.msra.mxu0 0.0
          %1670 = vmatprep.subr.mxu0 0.0
          %1671 = vmatpush1.msra.mxu0 0.0
          %1672 = vmatprep.subr.mxu0 0.0
          %1673 = vmatpush1.msra.mxu0 0.0
          %1674 = vmatprep.subr.mxu0 0.0
          %1675 = vmatpush1.msra.mxu0 0.0
          %1676 = vmatprep.subr.mxu0 0.0
          %1677 = vmatpush1.msra.mxu0 0.0
          %1678 = vmatprep.subr.mxu0 0.0
          %1679 = vmatpush1.msra.mxu0 0.0
          %1680 = vmatprep.subr.mxu0 0.0
          %1681 = vmatpush1.msra.mxu0 0.0
          %1682 = vmatprep.subr.mxu0 0.0
          %1683 = vmatpush1.msra.mxu0 0.0
          %1684 = vmatprep.subr.mxu0 0.0
          %1685 = vmatpush1.msra.mxu0 0.0
          %1686 = vmatprep.subr.mxu0 0.0
          %1687 = vmatpush1.msra.mxu0 0.0
          %1688 = vmatprep.subr.mxu0 0.0
          %1689 = vmatpush1.msra.mxu0 0.0
          %1690 = vmatprep.subr.mxu0 0.0
          %1691 = vmatpush1.msra.mxu0 0.0
          %1692 = vmatprep.subr.mxu0 0.0
          %1693 = vmatpush1.msra.mxu0 0.0
          %1694 = vmatprep.subr.mxu0 0.0
          %1695 = vmatpush1.msra.mxu0 0.0
          %1696 = vmatprep.subr.mxu0 0.0
          %1697 = vmatpush1.msra.mxu0 0.0
          %1698 = vmatprep.subr.mxu0 0.0
          %1699 = vmatpush1.msra.mxu0 0.0
          %1700 = vmatprep.subr.mxu0 0.0
          %1701 = vmatpush1.msra.mxu0 0.0
          %1702 = vmatprep.subr.mxu0 0.0
          %1703 = vmatpush1.msra.mxu0 0.0
          %1704 = vmatprep.subr.mxu0 0.0
          %1705 = vmatpush1.msra.mxu0 0.0
          %1706 = vmatprep.subr.mxu0 0.0
          %1707 = vmatpush1.msra.mxu0 0.0
          %1708 = vmatprep.subr.mxu0 0.0
          %1709 = vmatpush1.msra.mxu0 0.0
          %1710 = vmatprep.subr.mxu0 0.0
          %1711 = vmatpush1.msra.mxu0 0.0
          %1712 = vmatprep.subr.mxu0 0.0
          %1713 = vmatpush1.msra.mxu0 0.0
          %1714 = vmatprep.mubr.f32.mxu0 0.0
          %1715 = vmatmul.mubr.f32.gmra.mrb[0].mxu0 %v1648
          %v1716 = vpop.f32.mrb[0].mxu0
          %v1717 = vadd.f32 0.0, %v1716
          %v1718 = vpop.f32.mrb[0].mxu0
          %1719 = vdwg.mxu0
          %v1721 = vsel %vm448, %v1494, 0
          %1723 = vmatprep.subr.mxu0 0.0
          %1724 = vmatpush1.msra.mxu0 %v1500
          %1725 = vmatprep.subr.mxu0 0.0
          %1726 = vmatpush1.msra.mxu0 0.0
          %1727 = vmatprep.subr.mxu0 0.0
          %1728 = vmatpush1.msra.mxu0 0.0
          %1729 = vmatprep.subr.mxu0 0.0
          %1730 = vmatpush1.msra.mxu0 0.0
          %1731 = vmatprep.subr.mxu0 0.0
          %1732 = vmatpush1.msra.mxu0 0.0
          %1733 = vmatprep.subr.mxu0 0.0
          %1734 = vmatpush1.msra.mxu0 0.0
          %1735 = vmatprep.subr.mxu0 0.0
          %1736 = vmatpush1.msra.mxu0 0.0
          %1737 = vmatprep.subr.mxu0 0.0
          %1738 = vmatpush1.msra.mxu0 0.0
          %1739 = vmatprep.subr.mxu0 0.0
          %1740 = vmatpush1.msra.mxu0 0.0
          %1741 = vmatprep.subr.mxu0 0.0
          %1742 = vmatpush1.msra.mxu0 0.0
          %1743 = vmatprep.subr.mxu0 0.0
          %1744 = vmatpush1.msra.mxu0 0.0
          %1745 = vmatprep.subr.mxu0 0.0
          %1746 = vmatpush1.msra.mxu0 0.0
          %1747 = vmatprep.subr.mxu0 0.0
          %1748 = vmatpush1.msra.mxu0 0.0
          %1749 = vmatprep.subr.mxu0 0.0
          %1750 = vmatpush1.msra.mxu0 0.0
          %1751 = vmatprep.subr.mxu0 0.0
          %1752 = vmatpush1.msra.mxu0 0.0
          %1753 = vmatprep.subr.mxu0 0.0
          %1754 = vmatpush1.msra.mxu0 0.0
          %1755 = vmatprep.subr.mxu0 0.0
          %1756 = vmatpush1.msra.mxu0 0.0
          %1757 = vmatprep.subr.mxu0 0.0
          %1758 = vmatpush1.msra.mxu0 0.0
          %1759 = vmatprep.subr.mxu0 0.0
          %1760 = vmatpush1.msra.mxu0 0.0
          %1761 = vmatprep.subr.mxu0 0.0
          %1762 = vmatpush1.msra.mxu0 0.0
          %1763 = vmatprep.subr.mxu0 0.0
          %1764 = vmatpush1.msra.mxu0 0.0
          %1765 = vmatprep.subr.mxu0 0.0
          %1766 = vmatpush1.msra.mxu0 0.0
          %1767 = vmatprep.subr.mxu0 0.0
          %1768 = vmatpush1.msra.mxu0 0.0
          %1769 = vmatprep.subr.mxu0 0.0
          %1770 = vmatpush1.msra.mxu0 0.0
          %1771 = vmatprep.subr.mxu0 0.0
          %1772 = vmatpush1.msra.mxu0 0.0
          %1773 = vmatprep.subr.mxu0 0.0
          %1774 = vmatpush1.msra.mxu0 0.0
          %1775 = vmatprep.subr.mxu0 0.0
          %1776 = vmatpush1.msra.mxu0 0.0
          %1777 = vmatprep.subr.mxu0 0.0
          %1778 = vmatpush1.msra.mxu0 0.0
          %1779 = vmatprep.subr.mxu0 0.0
          %1780 = vmatpush1.msra.mxu0 0.0
          %1781 = vmatprep.subr.mxu0 0.0
          %1782 = vmatpush1.msra.mxu0 0.0
          %1783 = vmatprep.subr.mxu0 0.0
          %1784 = vmatpush1.msra.mxu0 0.0
          %1785 = vmatprep.subr.mxu0 0.0
          %1786 = vmatpush1.msra.mxu0 0.0
          %1787 = vmatprep.mubr.f32.mxu0 0.0
          %1788 = vmatmul.mubr.f32.gmra.mrb[0].mxu0 %v1721
          %v1789 = vpop.f32.mrb[0].mxu0
          %v1790 = vadd.f32 0.0, %v1789
          %v1791 = vpop.f32.mrb[0].mxu0
          %1792 = vdwg.mxu0
          %1794 = vrot.lane.b32.xlu0 %v1644, 8
          %v1795 = vpop.permute.xlu0 %1794
          %1798 = vrot.lane.b32.xlu0 %v1717, 16
          %v1799 = vpop.permute.xlu0 %1798
          %1802 = vrot.lane.b32.xlu0 %v1790, 24
          %v1803 = vpop.permute.xlu0 %1802
          %v1805 = vsel %vm448, %v1571, %v1795
          %vm1806 = vcmask 130048
          %v1807 = vsel %vm1806, %v1805, %v1799
          %vm1808 = vcmask 195584
          %v1809 = vsel %vm1808, %v1807, %v1803
          %v1810 = vld [vmem:[#allocation10] sm:$0xff]
          %v1811 = vld [vmem:[#allocation10 + $0x8] sm:$0xff]
          %v1812 = vld [vmem:[#allocation10 + $0x10] sm:$0xff]
          %v1813 = vld [vmem:[#allocation10 + $0x18] sm:$0xff]
          %v1814 = vld [vmem:[#allocation12] sm:$0x1]
          %v1816 = vlaneseq
          %v1817 = vshrl.u32 %v1816, 7
          %v1818 = vsub.s32 0, %v1817
          %v1819 = vrot.slane %v1814, %v1818
          %v1822 = vsel %vm311, %v1809, 0
          %1824 = vmatprep.subr.mxu0 0.0
          %1825 = vmatpush1.msra.mxu0 %v1810
          %1826 = vmatprep.subr.mxu0 0.0
          %1827 = vmatpush1.msra.mxu0 %v1811
          %1828 = vmatprep.subr.mxu0 0.0
          %1829 = vmatpush1.msra.mxu0 %v1812
          %1830 = vmatprep.subr.mxu0 0.0
          %1831 = vmatpush1.msra.mxu0 %v1813
          %1832 = vmatprep.subr.mxu0 0.0
          %1833 = vmatpush1.msra.mxu0 0.0
          %1834 = vmatprep.subr.mxu0 0.0
          %1835 = vmatpush1.msra.mxu0 0.0
          %1836 = vmatprep.subr.mxu0 0.0
          %1837 = vmatpush1.msra.mxu0 0.0
          %1838 = vmatprep.subr.mxu0 0.0
          %1839 = vmatpush1.msra.mxu0 0.0
          %1840 = vmatprep.subr.mxu0 0.0
          %1841 = vmatpush1.msra.mxu0 0.0
          %1842 = vmatprep.subr.mxu0 0.0
          %1843 = vmatpush1.msra.mxu0 0.0
          %1844 = vmatprep.subr.mxu0 0.0
          %1845 = vmatpush1.msra.mxu0 0.0
          %1846 = vmatprep.subr.mxu0 0.0
          %1847 = vmatpush1.msra.mxu0 0.0
          %1848 = vmatprep.subr.mxu0 0.0
          %1849 = vmatpush1.msra.mxu0 0.0
          %1850 = vmatprep.subr.mxu0 0.0
          %1851 = vmatpush1.msra.mxu0 0.0
          %1852 = vmatprep.subr.mxu0 0.0
          %1853 = vmatpush1.msra.mxu0 0.0
          %1854 = vmatprep.subr.mxu0 0.0
          %1855 = vmatpush1.msra.mxu0 0.0
          %1856 = vmatprep.subr.mxu0 0.0
          %1857 = vmatpush1.msra.mxu0 0.0
          %1858 = vmatprep.subr.mxu0 0.0
          %1859 = vmatpush1.msra.mxu0 0.0
          %1860 = vmatprep.subr.mxu0 0.0
          %1861 = vmatpush1.msra.mxu0 0.0
          %1862 = vmatprep.subr.mxu0 0.0
          %1863 = vmatpush1.msra.mxu0 0.0
          %1864 = vmatprep.subr.mxu0 0.0
          %1865 = vmatpush1.msra.mxu0 0.0
          %1866 = vmatprep.subr.mxu0 0.0
          %1867 = vmatpush1.msra.mxu0 0.0
          %1868 = vmatprep.subr.mxu0 0.0
          %1869 = vmatpush1.msra.mxu0 0.0
          %1870 = vmatprep.subr.mxu0 0.0
          %1871 = vmatpush1.msra.mxu0 0.0
          %1872 = vmatprep.subr.mxu0 0.0
          %1873 = vmatpush1.msra.mxu0 0.0
          %1874 = vmatprep.subr.mxu0 0.0
          %1875 = vmatpush1.msra.mxu0 0.0
          %1876 = vmatprep.subr.mxu0 0.0
          %1877 = vmatpush1.msra.mxu0 0.0
          %1878 = vmatprep.subr.mxu0 0.0
          %1879 = vmatpush1.msra.mxu0 0.0
          %1880 = vmatprep.subr.mxu0 0.0
          %1881 = vmatpush1.msra.mxu0 0.0
          %1882 = vmatprep.subr.mxu0 0.0
          %1883 = vmatpush1.msra.mxu0 0.0
          %1884 = vmatprep.subr.mxu0 0.0
          %1885 = vmatpush1.msra.mxu0 0.0
          %1886 = vmatprep.subr.mxu0 0.0
          %1887 = vmatpush1.msra.mxu0 0.0
          %1888 = vmatprep.mubr.f32.mxu0 0.0
          %1889 = vmatmul.mubr.f32.gmra.mrb[0].mxu0 %v1822
          %v1890 = vpop.f32.mrb[0].mxu0
          %v1891 = vadd.f32 %v1819, %v1890
          %v1892 = vpop.f32.mrb[0].mxu0
          %1893 = vdwg.mxu0
          %s1894 = smul.u32 %s1424, 8
          %s1895 = scalar_lea.vmem %s296, %s1894 [#allocation13]
          %1896 = vst.msk [vmem:[%s1895] sm:$0xff] %vm311, %v1891
        $region65: #{tpu_custom_call.1} parent=39 // loop_footer
          %s1428 = sadd.s32 1, %s1424
        $region66: #{tpu_custom_call.1} parent=39 // loop_footer_branch
          %1423 = sbr.rel target = $region62
        $region67: #{tpu_custom_call.1} parent=39 // loop_exit
          _
        %s1897 = sand.u32 %s142, 1
        %s1898 = scalar_lea.sflag [#allocation6], %s1897
        %s1899 = sand.u32 %s142, 1
        %s1900 = smul.addr %s1899, 24
        %s1901 = scalar_lea.vmem [#allocation13], %s1900
        // Predicated region
        $region68: #{tpu_custom_call.1} parent=39 // pred_check
          %p1902 = pneg %p152
        $region69: #{tpu_custom_call.1} parent=39 // pred_check_branch
          %1904 = sbr.rel (%p1902) target = $region71
        $region70: #{tpu_custom_call.1} parent=39 // pred_region
          %s1906 = ssub.s32 384, 384
          %1907 = vsyncadd %s1898, %s1906
          %s1908 = smul.addr %s24, 3
          %s1909 = smul.addr %s1908, 128
          %s1910 = scalar_lea.hbm %s5, %s1909
          %s1911 = sshll.u32 %s1901, 4
          %s1912 = int_to_ptr.vmem [resolvable:$true] %s1911
          %1917 = dma.vmem_to_hbm [thread:$0]  %s1912, 384, %s1910, %s1898, 128, 128, 8
        $region71: #{tpu_custom_call.1} parent=39 // pred_fallthru
          _
      $region40: #{tpu_custom_call.1} parent=5 // pred_fallthru
        _
      %p1918 = scmp.le.s32.totalorder 2, %s19
      // Predicated region
      $region72: #{tpu_custom_call.1} parent=5 // pred_check
        %p1919 = pneg %p1918
      $region73: #{tpu_custom_call.1} parent=5 // pred_check_branch
        %1921 = sbr.rel (%p1919) target = $region75
      $region74: #{tpu_custom_call.1} parent=5 // pred_region
        %s1922 = ssub.s32 %s19, 2
        // Predicated region
        $region76: #{tpu_custom_call.1} parent=74 // pred_check
          %p1923 = pneg %p158
        $region77: #{tpu_custom_call.1} parent=74 // pred_check_branch
          %1925 = sbr.rel (%p1923) target = $region79
        $region78: #{tpu_custom_call.1} parent=74 // pred_region
          %s1926 = sand.u32 %s143, 1
          %s1927 = scalar_lea.sflag [#allocation6], %s1926
          %s1928 = sand.u32 %s143, 1
          %s1929 = smul.addr %s1928, 24
          %s1930 = scalar_lea.vmem [#allocation13], %s1929
          %1931 = dma.done %s1927, 384
        $region79: #{tpu_custom_call.1} parent=74 // pred_fallthru
          _
      $region75: #{tpu_custom_call.1} parent=5 // pred_fallthru
        _
    $region6: #{tpu_custom_call.1} parent=1 // loop_footer
      %s23 = sadd.s32 1, %s19
    $region7: #{tpu_custom_call.1} parent=1 // loop_footer_branch
      %18 = sbr.rel target = $region3
    $region8: #{tpu_custom_call.1} parent=1 // loop_exit
      _
    %1932 = vsyncpa [#allocation5], 1
    %s1933 = scalar_lea.sflag [#allocation5], 1
    %1934 = vsyncpa %s1933, 1
    %1935 = vsyncpa [#allocation8], 1
    %1936 = vsyncpa [#allocation11], 1
    %1937 = vsyncpa [#allocation6], 1
    %s1938 = scalar_lea.sflag [#allocation6], 1
    %1939 = vsyncpa %s1938, 1

</llo_original>
